<compile_context>
chip_gen: v7x
topology: tpu7x:2x2x1
jax: 0.10.0
libtpu: 0.0.40
codegen_flags: <defaults>
</compile_context>

<pallas_src>
import functools

import jax
import jax.numpy as jnp
from jax.experimental import pallas as pl
from jax.experimental.pallas import tpu as pltpu


# ----------------------------------------------------------------------------
# Fused kernel factory: L LSTM layers (time loop unrolled) + MLP head.
# B passed here is the *padded* batch (multiple of 8).
# ----------------------------------------------------------------------------
def make_fused_kernel(L, T, B, H, act_name):
    def kernel(*refs):
        x_ref = refs[0]                                   # [T*B, I]
        pos = 1
        layer_refs = []
        for _ in range(L):                                # (w_ih [.,4H], w_hh [H,4H], b [1,4H])
            layer_refs.append((refs[pos], refs[pos + 1], refs[pos + 2]))
            pos += 3
        h0_ref, c0_ref = refs[pos], refs[pos + 1]         # [L, B, H] each
        pos += 2
        w1_ref, b1_ref, w2_ref, b2_ref = refs[pos:pos + 4]  # [H,U],[1,U],[1,U],[1,1]
        pos += 4
        mask_ref = refs[pos]                              # [B, U] scaled keep mask
        pos += 1
        out_ref, hT_ref, cT_ref = refs[pos:pos + 3]       # [B,1],[L,B,H],[L,B,H]
        pos += 3
        seq_sc = refs[pos]                                # VMEM [T*B, H]  inter-layer seq
        gx_sc = refs[pos + 1]                             # VMEM [T*B, 4H] hoisted projection

        h = None
        for l in range(L):
            w_ih_ref, w_hh_ref, b_ref = layer_refs[l]
            # Hoisted input projection for all T timesteps + hoisted bias add,
            # written once into a VMEM scratch (per-step reads are static,
            # sublane-aligned ref slices -> no per-step relayout).
            src = x_ref[...] if l == 0 else seq_sc[...]   # [T*B, I or H]
            gx_sc[...] = (jnp.dot(src, w_ih_ref[...],
                                  preferred_element_type=jnp.float32)
                          + b_ref[...])                   # [T*B, 4H]
            w_hh = w_hh_ref[...]                          # [H, 4H], loaded once
            h = h0_ref[l]                                 # [B, H]
            c = c0_ref[l]                                 # [B, H]

            for t in range(T):                            # serial recurrence
                gates = gx_sc[t * B:(t + 1) * B, :] + jnp.dot(
                    h, w_hh, preferred_element_type=jnp.float32)     # [B, 4H]
                # Full-width transcendentals on the whole [B, 4H] vreg (EUP slot
                # is otherwise idle); extract the gate slices afterwards.
                # PyTorch gate order: (i, f, g, o).
                sig = jax.nn.sigmoid(gates)
                tan = jnp.tanh(gates)
                i_g = sig[:, 0 * H:1 * H]
                f_g = sig[:, 1 * H:2 * H]
                g_g = tan[:, 2 * H:3 * H]
                o_g = sig[:, 3 * H:4 * H]
                c = f_g * c + i_g * g_g
                h = o_g * jnp.tanh(c)
                if l < L - 1:
                    # B is a multiple of 8 -> sublane-tile-aligned full store.
                    seq_sc[t * B:(t + 1) * B, :] = h
            hT_ref[l] = h
            cT_ref[l] = c

        # Head: Linear -> activation -> dropout(mask) -> Linear (all in VMEM).
        z = jnp.dot(h, w1_ref[...],
                    preferred_element_type=jnp.float32) + b1_ref[...]   # [B, U]
        if act_name == 'tanh':
            z = jnp.tanh(z)
        else:
            z = jnp.maximum(z, 0.0)
        # Dropout: precomputed keep mask already scaled by 1/(1-p) (ones if p=0).
        z = z * mask_ref[...]
        # Final [B,U] x [U,1] projection on the VPU: multiply by the single
        # output row and reduce over lanes (no second MXU weight push).
        out = jnp.sum(z * w2_ref[...], axis=-1, keepdims=True) + b2_ref[...]  # [B, 1]
        out_ref[...] = out.astype(out_ref.dtype)

    return kernel


# ----------------------------------------------------------------------------
# Wrapper: one pallas_call for the whole forward pass.
# ----------------------------------------------------------------------------
def rnn_predictor_forward(x, hidden, params, *, activation, dropout_rate, rng_key):
    h0_all, c0_all = hidden                    # each [L, B, H]
    L, B, H = h0_all.shape
    _, T, I = x.shape
    U = params['w1'].shape[1]

    # Pad batch to the 8-sublane tile so the serial recurrence runs on clean
    # full-tile (8, lanes) operands; slice the pad rows off afterwards.
    B_pad = ((B + 7) // 8) * 8
    pad_b = B_pad - B
    if pad_b:
        x = jnp.pad(x, ((0, pad_b), (0, 0), (0, 0)))
        h0_all = jnp.pad(h0_all, ((0, 0), (0, pad_b), (0, 0)))
        c0_all = jnp.pad(c0_all, ((0, 0), (0, pad_b), (0, 0)))

    # [B_pad, T, I] -> [T, B_pad, I] -> [T*B_pad, I] (timestep-major rows).
    x_flat = jnp.transpose(x, (1, 0, 2)).reshape(T * B_pad, I)

    # Dropout keep-mask generated host-side (F.dropout default training=True ->
    # the module always applies it); scale 1/(1-p) is folded into the mask.
    # TODO(synk): RNG stream differs from torch's; same Bernoulli(1-p) law.
    if dropout_rate > 0.0:
        keep = jax.random.bernoulli(rng_key, 1.0 - dropout_rate, (B_pad, U))
        mask = keep.astype(jnp.float32) * (1.0 / (1.0 - dropout_rate))
    else:
        mask = jnp.ones((B_pad, U), jnp.float32)

    vmem = pl.BlockSpec(memory_space=pltpu.MemorySpace.VMEM)

    args = [x_flat]
    for l in range(L):
        args += [params['w_ih'][l], params['w_hh'][l], params['b'][l]]
    args += [h0_all, c0_all,
             params['w1'], params['b1'],
             jnp.transpose(params['w2']),      # [U,1] -> [1,U] row for VPU reduce
             params['b2'],
             mask]

    out, hT, cT = pl.pallas_call(
        make_fused_kernel(L, T, B_pad, H, activation),
        out_shape=[jax.ShapeDtypeStruct((B_pad, 1), jnp.float32),
                   jax.ShapeDtypeStruct((L, B_pad, H), jnp.float32),
                   jax.ShapeDtypeStruct((L, B_pad, H), jnp.float32)],
        in_specs=[vmem] * len(args),
        out_specs=[vmem, vmem, vmem],
        scratch_shapes=[pltpu.VMEM((T * B_pad, H), jnp.float32),      # inter-layer seq
                        pltpu.VMEM((T * B_pad, 4 * H), jnp.float32)],  # hoisted gx
    )(*args)
    return out[:B], (hT[:, :B], cT[:, :B])


# ----------------------------------------------------------------------------
# Pure-JAX reference (correctness check only; PyTorch (i,f,g,o) gate order).
# ----------------------------------------------------------------------------
def reference_forward(x, hidden, params, *, activation):
    h0_all, c0_all = hidden
    L = h0_all.shape[0]
    seq = jnp.transpose(x, (1, 0, 2))          # [T, B, I]
    h_finals, c_finals = [], []
    inp = seq
    for l in range(L):
        w_ih, w_hh, b = params['w_ih'][l], params['w_hh'][l], params['b'][l]
        H = w_hh.shape[0]

        def step(carry, x_t, w_ih=w_ih, w_hh=w_hh, b=b, H=H):
            h, c = carry
            gates = x_t @ w_ih + h @ w_hh + b
            i = jax.nn.sigmoid(gates[:, 0 * H:1 * H])
            f = jax.nn.sigmoid(gates[:, 1 * H:2 * H])
            g = jnp.tanh(gates[:, 2 * H:3 * H])
            o = jax.nn.sigmoid(gates[:, 3 * H:4 * H])
            c_new = f * c + i * g
            h_new = o * jnp.tanh(c_new)
            return (h_new, c_new), h_new

        (hT, cT), y = jax.lax.scan(step, (h0_all[l], c0_all[l]), inp)
        h_finals.append(hT)
        c_finals.append(cT)
        inp = y
    z = h_finals[-1] @ params['w1'] + params['b1']
    z = jnp.tanh(z) if activation == 'tanh' else jnp.maximum(z, 0.0)
    out = z @ params['w2'] + params['b2']
    return out, (jnp.stack(h_finals, 0), jnp.stack(c_finals, 0))


def init_params(key, I, H, L, U):
    """LSTM gates packed in PyTorch's (i, f, g, o) column order."""
    params = {'w_ih': [], 'w_hh': [], 'b': []}
    k = 1.0 / jnp.sqrt(H)
    for l in range(L):
        in_l = I if l == 0 else H
        key, k1, k2, k3, k4 = jax.random.split(key, 5)
        params['w_ih'].append(jax.random.uniform(k1, (in_l, 4 * H), jnp.float32, -k, k))
        params['w_hh'].append(jax.random.uniform(k2, (H, 4 * H), jnp.float32, -k, k))
        b_ih = jax.random.uniform(k3, (4 * H,), jnp.float32, -k, k)
        b_hh = jax.random.uniform(k4, (4 * H,), jnp.float32, -k, k)
        params['b'].append((b_ih + b_hh)[None, :])          # [1, 4H]
    key, k1, k2, k3, k4 = jax.random.split(key, 5)
    k_l1 = 1.0 / jnp.sqrt(H)
    k_l2 = 1.0 / jnp.sqrt(U)
    params['w1'] = jax.random.uniform(k1, (H, U), jnp.float32, -k_l1, k_l1)
    params['b1'] = jax.random.uniform(k2, (1, U), jnp.float32, -k_l1, k_l1)
    params['w2'] = jax.random.uniform(k3, (U, 1), jnp.float32, -k_l2, k_l2)
    params['b2'] = jax.random.uniform(k4, (1, 1), jnp.float32, -k_l2, k_l2)
    return params


if __name__ == "__main__":
    # Module hyperparameters (args dict of RNNPredictor)
    B, T = 2, 8              # batch, sequence length
    I = 16                   # size_of_one_hot
    H = 32                   # units_of_rnn
    L = 2                    # layers_of_rnn
    U = 16                   # units_of_nn
    ACT = 'tanh'             # activation

    key = jax.random.PRNGKey(0)
    kx, kp = jax.random.split(key)
    x = jax.random.normal(kx, (B, T, I), dtype=jnp.float32)
    hidden = (jnp.zeros((L, B, H), jnp.float32),   # h0  (init_states)
              jnp.zeros((L, B, H), jnp.float32))   # c0
    params = init_params(kp, I, H, L, U)

    # 1) Deterministic run (dropout_rate=0.0): exact check vs. pure-JAX reference.
    fwd = jax.jit(functools.partial(rnn_predictor_forward,
                                    activation=ACT, dropout_rate=0.0,
                                    rng_key=jax.random.PRNGKey(0)))
    out, (h_all, c_all) = fwd(x, hidden, params)
    jax.block_until_ready((out, h_all, c_all))

    ref_out, (ref_h, ref_c) = reference_forward(x, hidden, params, activation=ACT)
    assert out.shape == (B, 1) and h_all.shape == (L, B, H) and c_all.shape == (L, B, H)
    assert jnp.allclose(out, ref_out, atol=1e-4, rtol=1e-4)
    assert jnp.allclose(h_all, ref_h, atol=1e-4, rtol=1e-4)
    assert jnp.allclose(c_all, ref_c, atol=1e-4, rtol=1e-4)

    # 2) Dropout run (exercises the masked head path): shape/finiteness check.
    fwd_do = jax.jit(functools.partial(rnn_predictor_forward,
                                       activation=ACT, dropout_rate=0.3,
                                       rng_key=jax.random.PRNGKey(1234)))
    out_do, _ = fwd_do(x, hidden, params)
    jax.block_until_ready(out_do)
    assert out_do.shape == (B, 1)
    assert bool(jnp.all(jnp.isfinite(out_do)))

    print("KERNEL_OK")
</pallas_src>

<mosaic_0001>
module attributes {stable_mosaic.version = 11 : i64} {
  func.func @kernel(%arg0: memref<64x16xf32, #tpu.memory_space<vmem>>, %arg1: memref<16x128xf32, #tpu.memory_space<vmem>>, %arg2: memref<32x128xf32, #tpu.memory_space<vmem>>, %arg3: memref<1x128xf32, #tpu.memory_space<vmem>>, %arg4: memref<32x128xf32, #tpu.memory_space<vmem>>, %arg5: memref<32x128xf32, #tpu.memory_space<vmem>>, %arg6: memref<1x128xf32, #tpu.memory_space<vmem>>, %arg7: memref<2x8x32xf32, #tpu.memory_space<vmem>>, %arg8: memref<2x8x32xf32, #tpu.memory_space<vmem>>, %arg9: memref<32x16xf32, #tpu.memory_space<vmem>>, %arg10: memref<1x16xf32, #tpu.memory_space<vmem>>, %arg11: memref<1x16xf32, #tpu.memory_space<vmem>>, %arg12: memref<1x1xf32, #tpu.memory_space<vmem>>, %arg13: memref<8x16xf32, #tpu.memory_space<vmem>>, %arg14: memref<8x1xf32, #tpu.memory_space<vmem>>, %arg15: memref<2x8x32xf32, #tpu.memory_space<vmem>>, %arg16: memref<2x8x32xf32, #tpu.memory_space<vmem>>, %arg17: memref<64x32xf32, #tpu.memory_space<vmem>>, %arg18: memref<64x128xf32, #tpu.memory_space<vmem>>) attributes {dimension_semantics = [], scalar_prefetch = 0 : i64, scratch_operands = 2 : i64, tpu.core_type = #tpu.core_type<tc>} {
    %c0 = arith.constant 0 : index
    %c0_0 = arith.constant 0 : index
    %0 = vector.load %arg0[%c0, %c0_0] : memref<64x16xf32, #tpu.memory_space<vmem>>, vector<64x16xf32>
    %c0_1 = arith.constant 0 : index
    %c0_2 = arith.constant 0 : index
    %1 = vector.load %arg1[%c0_1, %c0_2] : memref<16x128xf32, #tpu.memory_space<vmem>>, vector<16x128xf32>
    %cst = arith.constant dense<0.000000e+00> : vector<64x128xf32>
    %2 = tpu.matmul %0, %1, %cst {dimension_numbers = #tpu.dot_dimension_numbers<[1], [0], [0], [1], [0, 0, 1, 1], [], []>} : vector<64x16xf32>, vector<16x128xf32>, vector<64x128xf32> -> vector<64x128xf32>
    %c0_3 = arith.constant 0 : index
    %c0_4 = arith.constant 0 : index
    %3 = vector.load %arg3[%c0_3, %c0_4] : memref<1x128xf32, #tpu.memory_space<vmem>>, vector<1x128xf32>
    %4 = vector.broadcast %3 : vector<1x128xf32> to vector<64x128xf32>
    %5 = arith.addf %2, %4 : vector<64x128xf32>
    %c0_5 = arith.constant 0 : index
    %c0_6 = arith.constant 0 : index
    %6 = vector.load %arg18[%c0_5, %c0_6] : memref<64x128xf32, #tpu.memory_space<vmem>>, vector<64x128xf32>
    tpu.vector_store %arg18[%c0_5, %c0_6], %5 {strides = array<i32>} : memref<64x128xf32, #tpu.memory_space<vmem>>, vector<64x128xf32>,
    %c0_7 = arith.constant 0 : index
    %c0_8 = arith.constant 0 : index
    %7 = vector.load %arg2[%c0_7, %c0_8] : memref<32x128xf32, #tpu.memory_space<vmem>>, vector<32x128xf32>
    %c0_9 = arith.constant 0 : index
    %c0_10 = arith.constant 0 : index
    %c0_11 = arith.constant 0 : index
    %8 = vector.load %arg7[%c0_9, %c0_10, %c0_11] : memref<2x8x32xf32, #tpu.memory_space<vmem>>, vector<1x8x32xf32>
    %9 = vector.shape_cast %8 : vector<1x8x32xf32> to vector<8x32xf32>
    %c0_12 = arith.constant 0 : index
    %c0_13 = arith.constant 0 : index
    %c0_14 = arith.constant 0 : index
    %10 = vector.load %arg8[%c0_12, %c0_13, %c0_14] : memref<2x8x32xf32, #tpu.memory_space<vmem>>, vector<1x8x32xf32>
    %11 = vector.shape_cast %10 : vector<1x8x32xf32> to vector<8x32xf32>
    %c0_15 = arith.constant 0 : index
    %c0_16 = arith.constant 0 : index
    %12 = vector.load %arg18[%c0_15, %c0_16] : memref<64x128xf32, #tpu.memory_space<vmem>>, vector<8x128xf32>
    %cst_17 = arith.constant dense<0.000000e+00> : vector<8x128xf32>
    %13 = tpu.matmul %9, %7, %cst_17 {dimension_numbers = #tpu.dot_dimension_numbers<[1], [0], [0], [1], [0, 0, 1, 1], [], []>} : vector<8x32xf32>, vector<32x128xf32>, vector<8x128xf32> -> vector<8x128xf32>
    %14 = arith.addf %12, %13 : vector<8x128xf32>
    %15 = arith.negf %14 : vector<8x128xf32>
    %16 = math.exp %15 : vector<8x128xf32>
    %cst_18 = arith.constant 1.000000e+00 : f32
    %17 = vector.broadcast %cst_18 : f32 to vector<8x128xf32>
    %18 = arith.addf %17, %16 : vector<8x128xf32>
    %19 = arith.divf %17, %18 : vector<8x128xf32>
    %20 = math.tanh %14 : vector<8x128xf32>
    %21 = vector.extract_strided_slice %19 {offsets = [0, 0], sizes = [8, 32], strides = [1, 1]} : vector<8x128xf32> to vector<8x32xf32>
    %22 = vector.extract_strided_slice %19 {offsets = [0, 32], sizes = [8, 32], strides = [1, 1]} : vector<8x128xf32> to vector<8x32xf32>
    %23 = vector.extract_strided_slice %20 {offsets = [0, 64], sizes = [8, 32], strides = [1, 1]} : vector<8x128xf32> to vector<8x32xf32>
    %24 = vector.extract_strided_slice %19 {offsets = [0, 96], sizes = [8, 32], strides = [1, 1]} : vector<8x128xf32> to vector<8x32xf32>
    %25 = arith.mulf %22, %11 : vector<8x32xf32>
    %26 = arith.mulf %21, %23 : vector<8x32xf32>
    %27 = arith.addf %25, %26 : vector<8x32xf32>
    %28 = math.tanh %27 : vector<8x32xf32>
    %29 = arith.mulf %24, %28 : vector<8x32xf32>
    %c0_19 = arith.constant 0 : index
    %c0_20 = arith.constant 0 : index
    %30 = vector.load %arg17[%c0_19, %c0_20] : memref<64x32xf32, #tpu.memory_space<vmem>>, vector<8x32xf32>
    tpu.vector_store %arg17[%c0_19, %c0_20], %29 {strides = array<i32>} : memref<64x32xf32, #tpu.memory_space<vmem>>, vector<8x32xf32>,
    %c8 = arith.constant 8 : index
    %c0_21 = arith.constant 0 : index
    %31 = vector.load %arg18[%c8, %c0_21] : memref<64x128xf32, #tpu.memory_space<vmem>>, vector<8x128xf32>
    %cst_22 = arith.constant dense<0.000000e+00> : vector<8x128xf32>
    %32 = tpu.matmul %29, %7, %cst_22 {dimension_numbers = #tpu.dot_dimension_numbers<[1], [0], [0], [1], [0, 0, 1, 1], [], []>} : vector<8x32xf32>, vector<32x128xf32>, vector<8x128xf32> -> vector<8x128xf32>
    %33 = arith.addf %31, %32 : vector<8x128xf32>
    %34 = arith.negf %33 : vector<8x128xf32>
    %35 = math.exp %34 : vector<8x128xf32>
    %cst_23 = arith.constant 1.000000e+00 : f32
    %36 = vector.broadcast %cst_23 : f32 to vector<8x128xf32>
    %37 = arith.addf %36, %35 : vector<8x128xf32>
    %38 = arith.divf %36, %37 : vector<8x128xf32>
    %39 = math.tanh %33 : vector<8x128xf32>
    %40 = vector.extract_strided_slice %38 {offsets = [0, 0], sizes = [8, 32], strides = [1, 1]} : vector<8x128xf32> to vector<8x32xf32>
    %41 = vector.extract_strided_slice %38 {offsets = [0, 32], sizes = [8, 32], strides = [1, 1]} : vector<8x128xf32> to vector<8x32xf32>
    %42 = vector.extract_strided_slice %39 {offsets = [0, 64], sizes = [8, 32], strides = [1, 1]} : vector<8x128xf32> to vector<8x32xf32>
    %43 = vector.extract_strided_slice %38 {offsets = [0, 96], sizes = [8, 32], strides = [1, 1]} : vector<8x128xf32> to vector<8x32xf32>
    %44 = arith.mulf %41, %27 : vector<8x32xf32>
    %45 = arith.mulf %40, %42 : vector<8x32xf32>
    %46 = arith.addf %44, %45 : vector<8x32xf32>
    %47 = math.tanh %46 : vector<8x32xf32>
    %48 = arith.mulf %43, %47 : vector<8x32xf32>
    %c8_24 = arith.constant 8 : index
    %c0_25 = arith.constant 0 : index
    %49 = vector.load %arg17[%c8_24, %c0_25] : memref<64x32xf32, #tpu.memory_space<vmem>>, vector<8x32xf32>
    tpu.vector_store %arg17[%c8_24, %c0_25], %48 {strides = array<i32>} : memref<64x32xf32, #tpu.memory_space<vmem>>, vector<8x32xf32>,
    %c16 = arith.constant 16 : index
    %c0_26 = arith.constant 0 : index
    %50 = vector.load %arg18[%c16, %c0_26] : memref<64x128xf32, #tpu.memory_space<vmem>>, vector<8x128xf32>
    %cst_27 = arith.constant dense<0.000000e+00> : vector<8x128xf32>
    %51 = tpu.matmul %48, %7, %cst_27 {dimension_numbers = #tpu.dot_dimension_numbers<[1], [0], [0], [1], [0, 0, 1, 1], [], []>} : vector<8x32xf32>, vector<32x128xf32>, vector<8x128xf32> -> vector<8x128xf32>
    %52 = arith.addf %50, %51 : vector<8x128xf32>
    %53 = arith.negf %52 : vector<8x128xf32>
    %54 = math.exp %53 : vector<8x128xf32>
    %cst_28 = arith.constant 1.000000e+00 : f32
    %55 = vector.broadcast %cst_28 : f32 to vector<8x128xf32>
    %56 = arith.addf %55, %54 : vector<8x128xf32>
    %57 = arith.divf %55, %56 : vector<8x128xf32>
    %58 = math.tanh %52 : vector<8x128xf32>
    %59 = vector.extract_strided_slice %57 {offsets = [0, 0], sizes = [8, 32], strides = [1, 1]} : vector<8x128xf32> to vector<8x32xf32>
    %60 = vector.extract_strided_slice %57 {offsets = [0, 32], sizes = [8, 32], strides = [1, 1]} : vector<8x128xf32> to vector<8x32xf32>
    %61 = vector.extract_strided_slice %58 {offsets = [0, 64], sizes = [8, 32], strides = [1, 1]} : vector<8x128xf32> to vector<8x32xf32>
    %62 = vector.extract_strided_slice %57 {offsets = [0, 96], sizes = [8, 32], strides = [1, 1]} : vector<8x128xf32> to vector<8x32xf32>
    %63 = arith.mulf %60, %46 : vector<8x32xf32>
    %64 = arith.mulf %59, %61 : vector<8x32xf32>
    %65 = arith.addf %63, %64 : vector<8x32xf32>
    %66 = math.tanh %65 : vector<8x32xf32>
    %67 = arith.mulf %62, %66 : vector<8x32xf32>
    %c16_29 = arith.constant 16 : index
    %c0_30 = arith.constant 0 : index
    %68 = vector.load %arg17[%c16_29, %c0_30] : memref<64x32xf32, #tpu.memory_space<vmem>>, vector<8x32xf32>
    tpu.vector_store %arg17[%c16_29, %c0_30], %67 {strides = array<i32>} : memref<64x32xf32, #tpu.memory_space<vmem>>, vector<8x32xf32>,
    %c24 = arith.constant 24 : index
    %c0_31 = arith.constant 0 : index
    %69 = vector.load %arg18[%c24, %c0_31] : memref<64x128xf32, #tpu.memory_space<vmem>>, vector<8x128xf32>
    %cst_32 = arith.constant dense<0.000000e+00> : vector<8x128xf32>
    %70 = tpu.matmul %67, %7, %cst_32 {dimension_numbers = #tpu.dot_dimension_numbers<[1], [0], [0], [1], [0, 0, 1, 1], [], []>} : vector<8x32xf32>, vector<32x128xf32>, vector<8x128xf32> -> vector<8x128xf32>
    %71 = arith.addf %69, %70 : vector<8x128xf32>
    %72 = arith.negf %71 : vector<8x128xf32>
    %73 = math.exp %72 : vector<8x128xf32>
    %cst_33 = arith.constant 1.000000e+00 : f32
    %74 = vector.broadcast %cst_33 : f32 to vector<8x128xf32>
    %75 = arith.addf %74, %73 : vector<8x128xf32>
    %76 = arith.divf %74, %75 : vector<8x128xf32>
    %77 = math.tanh %71 : vector<8x128xf32>
    %78 = vector.extract_strided_slice %76 {offsets = [0, 0], sizes = [8, 32], strides = [1, 1]} : vector<8x128xf32> to vector<8x32xf32>
    %79 = vector.extract_strided_slice %76 {offsets = [0, 32], sizes = [8, 32], strides = [1, 1]} : vector<8x128xf32> to vector<8x32xf32>
    %80 = vector.extract_strided_slice %77 {offsets = [0, 64], sizes = [8, 32], strides = [1, 1]} : vector<8x128xf32> to vector<8x32xf32>
    %81 = vector.extract_strided_slice %76 {offsets = [0, 96], sizes = [8, 32], strides = [1, 1]} : vector<8x128xf32> to vector<8x32xf32>
    %82 = arith.mulf %79, %65 : vector<8x32xf32>
    %83 = arith.mulf %78, %80 : vector<8x32xf32>
    %84 = arith.addf %82, %83 : vector<8x32xf32>
    %85 = math.tanh %84 : vector<8x32xf32>
    %86 = arith.mulf %81, %85 : vector<8x32xf32>
    %c24_34 = arith.constant 24 : index
    %c0_35 = arith.constant 0 : index
    %87 = vector.load %arg17[%c24_34, %c0_35] : memref<64x32xf32, #tpu.memory_space<vmem>>, vector<8x32xf32>
    tpu.vector_store %arg17[%c24_34, %c0_35], %86 {strides = array<i32>} : memref<64x32xf32, #tpu.memory_space<vmem>>, vector<8x32xf32>,
    %c32 = arith.constant 32 : index
    %c0_36 = arith.constant 0 : index
    %88 = vector.load %arg18[%c32, %c0_36] : memref<64x128xf32, #tpu.memory_space<vmem>>, vector<8x128xf32>
    %cst_37 = arith.constant dense<0.000000e+00> : vector<8x128xf32>
    %89 = tpu.matmul %86, %7, %cst_37 {dimension_numbers = #tpu.dot_dimension_numbers<[1], [0], [0], [1], [0, 0, 1, 1], [], []>} : vector<8x32xf32>, vector<32x128xf32>, vector<8x128xf32> -> vector<8x128xf32>
    %90 = arith.addf %88, %89 : vector<8x128xf32>
    %91 = arith.negf %90 : vector<8x128xf32>
    %92 = math.exp %91 : vector<8x128xf32>
    %cst_38 = arith.constant 1.000000e+00 : f32
    %93 = vector.broadcast %cst_38 : f32 to vector<8x128xf32>
    %94 = arith.addf %93, %92 : vector<8x128xf32>
    %95 = arith.divf %93, %94 : vector<8x128xf32>
    %96 = math.tanh %90 : vector<8x128xf32>
    %97 = vector.extract_strided_slice %95 {offsets = [0, 0], sizes = [8, 32], strides = [1, 1]} : vector<8x128xf32> to vector<8x32xf32>
    %98 = vector.extract_strided_slice %95 {offsets = [0, 32], sizes = [8, 32], strides = [1, 1]} : vector<8x128xf32> to vector<8x32xf32>
    %99 = vector.extract_strided_slice %96 {offsets = [0, 64], sizes = [8, 32], strides = [1, 1]} : vector<8x128xf32> to vector<8x32xf32>
    %100 = vector.extract_strided_slice %95 {offsets = [0, 96], sizes = [8, 32], strides = [1, 1]} : vector<8x128xf32> to vector<8x32xf32>
    %101 = arith.mulf %98, %84 : vector<8x32xf32>
    %102 = arith.mulf %97, %99 : vector<8x32xf32>
    %103 = arith.addf %101, %102 : vector<8x32xf32>
    %104 = math.tanh %103 : vector<8x32xf32>
    %105 = arith.mulf %100, %104 : vector<8x32xf32>
    %c32_39 = arith.constant 32 : index
    %c0_40 = arith.constant 0 : index
    %106 = vector.load %arg17[%c32_39, %c0_40] : memref<64x32xf32, #tpu.memory_space<vmem>>, vector<8x32xf32>
    tpu.vector_store %arg17[%c32_39, %c0_40], %105 {strides = array<i32>} : memref<64x32xf32, #tpu.memory_space<vmem>>, vector<8x32xf32>,
    %c40 = arith.constant 40 : index
    %c0_41 = arith.constant 0 : index
    %107 = vector.load %arg18[%c40, %c0_41] : memref<64x128xf32, #tpu.memory_space<vmem>>, vector<8x128xf32>
    %cst_42 = arith.constant dense<0.000000e+00> : vector<8x128xf32>
    %108 = tpu.matmul %105, %7, %cst_42 {dimension_numbers = #tpu.dot_dimension_numbers<[1], [0], [0], [1], [0, 0, 1, 1], [], []>} : vector<8x32xf32>, vector<32x128xf32>, vector<8x128xf32> -> vector<8x128xf32>
    %109 = arith.addf %107, %108 : vector<8x128xf32>
    %110 = arith.negf %109 : vector<8x128xf32>
    %111 = math.exp %110 : vector<8x128xf32>
    %cst_43 = arith.constant 1.000000e+00 : f32
    %112 = vector.broadcast %cst_43 : f32 to vector<8x128xf32>
    %113 = arith.addf %112, %111 : vector<8x128xf32>
    %114 = arith.divf %112, %113 : vector<8x128xf32>
    %115 = math.tanh %109 : vector<8x128xf32>
    %116 = vector.extract_strided_slice %114 {offsets = [0, 0], sizes = [8, 32], strides = [1, 1]} : vector<8x128xf32> to vector<8x32xf32>
    %117 = vector.extract_strided_slice %114 {offsets = [0, 32], sizes = [8, 32], strides = [1, 1]} : vector<8x128xf32> to vector<8x32xf32>
    %118 = vector.extract_strided_slice %115 {offsets = [0, 64], sizes = [8, 32], strides = [1, 1]} : vector<8x128xf32> to vector<8x32xf32>
    %119 = vector.extract_strided_slice %114 {offsets = [0, 96], sizes = [8, 32], strides = [1, 1]} : vector<8x128xf32> to vector<8x32xf32>
    %120 = arith.mulf %117, %103 : vector<8x32xf32>
    %121 = arith.mulf %116, %118 : vector<8x32xf32>
    %122 = arith.addf %120, %121 : vector<8x32xf32>
    %123 = math.tanh %122 : vector<8x32xf32>
    %124 = arith.mulf %119, %123 : vector<8x32xf32>
    %c40_44 = arith.constant 40 : index
    %c0_45 = arith.constant 0 : index
    %125 = vector.load %arg17[%c40_44, %c0_45] : memref<64x32xf32, #tpu.memory_space<vmem>>, vector<8x32xf32>
    tpu.vector_store %arg17[%c40_44, %c0_45], %124 {strides = array<i32>} : memref<64x32xf32, #tpu.memory_space<vmem>>, vector<8x32xf32>,
    %c48 = arith.constant 48 : index
    %c0_46 = arith.constant 0 : index
    %126 = vector.load %arg18[%c48, %c0_46] : memref<64x128xf32, #tpu.memory_space<vmem>>, vector<8x128xf32>
    %cst_47 = arith.constant dense<0.000000e+00> : vector<8x128xf32>
    %127 = tpu.matmul %124, %7, %cst_47 {dimension_numbers = #tpu.dot_dimension_numbers<[1], [0], [0], [1], [0, 0, 1, 1], [], []>} : vector<8x32xf32>, vector<32x128xf32>, vector<8x128xf32> -> vector<8x128xf32>
    %128 = arith.addf %126, %127 : vector<8x128xf32>
    %129 = arith.negf %128 : vector<8x128xf32>
    %130 = math.exp %129 : vector<8x128xf32>
    %cst_48 = arith.constant 1.000000e+00 : f32
    %131 = vector.broadcast %cst_48 : f32 to vector<8x128xf32>
    %132 = arith.addf %131, %130 : vector<8x128xf32>
    %133 = arith.divf %131, %132 : vector<8x128xf32>
    %134 = math.tanh %128 : vector<8x128xf32>
    %135 = vector.extract_strided_slice %133 {offsets = [0, 0], sizes = [8, 32], strides = [1, 1]} : vector<8x128xf32> to vector<8x32xf32>
    %136 = vector.extract_strided_slice %133 {offsets = [0, 32], sizes = [8, 32], strides = [1, 1]} : vector<8x128xf32> to vector<8x32xf32>
    %137 = vector.extract_strided_slice %134 {offsets = [0, 64], sizes = [8, 32], strides = [1, 1]} : vector<8x128xf32> to vector<8x32xf32>
    %138 = vector.extract_strided_slice %133 {offsets = [0, 96], sizes = [8, 32], strides = [1, 1]} : vector<8x128xf32> to vector<8x32xf32>
    %139 = arith.mulf %136, %122 : vector<8x32xf32>
    %140 = arith.mulf %135, %137 : vector<8x32xf32>
    %141 = arith.addf %139, %140 : vector<8x32xf32>
    %142 = math.tanh %141 : vector<8x32xf32>
    %143 = arith.mulf %138, %142 : vector<8x32xf32>
    %c48_49 = arith.constant 48 : index
    %c0_50 = arith.constant 0 : index
    %144 = vector.load %arg17[%c48_49, %c0_50] : memref<64x32xf32, #tpu.memory_space<vmem>>, vector<8x32xf32>
    tpu.vector_store %arg17[%c48_49, %c0_50], %143 {strides = array<i32>} : memref<64x32xf32, #tpu.memory_space<vmem>>, vector<8x32xf32>,
    %c56 = arith.constant 56 : index
    %c0_51 = arith.constant 0 : index
    %145 = vector.load %arg18[%c56, %c0_51] : memref<64x128xf32, #tpu.memory_space<vmem>>, vector<8x128xf32>
    %cst_52 = arith.constant dense<0.000000e+00> : vector<8x128xf32>
    %146 = tpu.matmul %143, %7, %cst_52 {dimension_numbers = #tpu.dot_dimension_numbers<[1], [0], [0], [1], [0, 0, 1, 1], [], []>} : vector<8x32xf32>, vector<32x128xf32>, vector<8x128xf32> -> vector<8x128xf32>
    %147 = arith.addf %145, %146 : vector<8x128xf32>
    %148 = arith.negf %147 : vector<8x128xf32>
    %149 = math.exp %148 : vector<8x128xf32>
    %cst_53 = arith.constant 1.000000e+00 : f32
    %150 = vector.broadcast %cst_53 : f32 to vector<8x128xf32>
    %151 = arith.addf %150, %149 : vector<8x128xf32>
    %152 = arith.divf %150, %151 : vector<8x128xf32>
    %153 = math.tanh %147 : vector<8x128xf32>
    %154 = vector.extract_strided_slice %152 {offsets = [0, 0], sizes = [8, 32], strides = [1, 1]} : vector<8x128xf32> to vector<8x32xf32>
    %155 = vector.extract_strided_slice %152 {offsets = [0, 32], sizes = [8, 32], strides = [1, 1]} : vector<8x128xf32> to vector<8x32xf32>
    %156 = vector.extract_strided_slice %153 {offsets = [0, 64], sizes = [8, 32], strides = [1, 1]} : vector<8x128xf32> to vector<8x32xf32>
    %157 = vector.extract_strided_slice %152 {offsets = [0, 96], sizes = [8, 32], strides = [1, 1]} : vector<8x128xf32> to vector<8x32xf32>
    %158 = arith.mulf %155, %141 : vector<8x32xf32>
    %159 = arith.mulf %154, %156 : vector<8x32xf32>
    %160 = arith.addf %158, %159 : vector<8x32xf32>
    %161 = math.tanh %160 : vector<8x32xf32>
    %162 = arith.mulf %157, %161 : vector<8x32xf32>
    %c56_54 = arith.constant 56 : index
    %c0_55 = arith.constant 0 : index
    %163 = vector.load %arg17[%c56_54, %c0_55] : memref<64x32xf32, #tpu.memory_space<vmem>>, vector<8x32xf32>
    tpu.vector_store %arg17[%c56_54, %c0_55], %162 {strides = array<i32>} : memref<64x32xf32, #tpu.memory_space<vmem>>, vector<8x32xf32>,
    %c0_56 = arith.constant 0 : index
    %c0_57 = arith.constant 0 : index
    %c0_58 = arith.constant 0 : index
    %164 = vector.load %arg15[%c0_56, %c0_57, %c0_58] : memref<2x8x32xf32, #tpu.memory_space<vmem>>, vector<1x8x32xf32>
    %165 = vector.shape_cast %164 : vector<1x8x32xf32> to vector<8x32xf32>
    %166 = vector.shape_cast %162 : vector<8x32xf32> to vector<1x8x32xf32>
    tpu.vector_store %arg15[%c0_56, %c0_57, %c0_58], %166 {strides = array<i32>} : memref<2x8x32xf32, #tpu.memory_space<vmem>>, vector<1x8x32xf32>,
    %c0_59 = arith.constant 0 : index
    %c0_60 = arith.constant 0 : index
    %c0_61 = arith.constant 0 : index
    %167 = vector.load %arg16[%c0_59, %c0_60, %c0_61] : memref<2x8x32xf32, #tpu.memory_space<vmem>>, vector<1x8x32xf32>
    %168 = vector.shape_cast %167 : vector<1x8x32xf32> to vector<8x32xf32>
    %169 = vector.shape_cast %160 : vector<8x32xf32> to vector<1x8x32xf32>
    tpu.vector_store %arg16[%c0_59, %c0_60, %c0_61], %169 {strides = array<i32>} : memref<2x8x32xf32, #tpu.memory_space<vmem>>, vector<1x8x32xf32>,
    %c0_62 = arith.constant 0 : index
    %c0_63 = arith.constant 0 : index
    %170 = vector.load %arg17[%c0_62, %c0_63] : memref<64x32xf32, #tpu.memory_space<vmem>>, vector<64x32xf32>
    %c0_64 = arith.constant 0 : index
    %c0_65 = arith.constant 0 : index
    %171 = vector.load %arg4[%c0_64, %c0_65] : memref<32x128xf32, #tpu.memory_space<vmem>>, vector<32x128xf32>
    %cst_66 = arith.constant dense<0.000000e+00> : vector<64x128xf32>
    %172 = tpu.matmul %170, %171, %cst_66 {dimension_numbers = #tpu.dot_dimension_numbers<[1], [0], [0], [1], [0, 0, 1, 1], [], []>} : vector<64x32xf32>, vector<32x128xf32>, vector<64x128xf32> -> vector<64x128xf32>
    %c0_67 = arith.constant 0 : index
    %c0_68 = arith.constant 0 : index
    %173 = vector.load %arg6[%c0_67, %c0_68] : memref<1x128xf32, #tpu.memory_space<vmem>>, vector<1x128xf32>
    %174 = vector.broadcast %173 : vector<1x128xf32> to vector<64x128xf32>
    %175 = arith.addf %172, %174 : vector<64x128xf32>
    %c0_69 = arith.constant 0 : index
    %c0_70 = arith.constant 0 : index
    %176 = vector.load %arg18[%c0_69, %c0_70] : memref<64x128xf32, #tpu.memory_space<vmem>>, vector<64x128xf32>
    tpu.vector_store %arg18[%c0_69, %c0_70], %175 {strides = array<i32>} : memref<64x128xf32, #tpu.memory_space<vmem>>, vector<64x128xf32>,
    %c0_71 = arith.constant 0 : index
    %c0_72 = arith.constant 0 : index
    %177 = vector.load %arg5[%c0_71, %c0_72] : memref<32x128xf32, #tpu.memory_space<vmem>>, vector<32x128xf32>
    %c1 = arith.constant 1 : index
    %c0_73 = arith.constant 0 : index
    %c0_74 = arith.constant 0 : index
    %178 = vector.load %arg7[%c1, %c0_73, %c0_74] : memref<2x8x32xf32, #tpu.memory_space<vmem>>, vector<1x8x32xf32>
    %179 = vector.shape_cast %178 : vector<1x8x32xf32> to vector<8x32xf32>
    %c1_75 = arith.constant 1 : index
    %c0_76 = arith.constant 0 : index
    %c0_77 = arith.constant 0 : index
    %180 = vector.load %arg8[%c1_75, %c0_76, %c0_77] : memref<2x8x32xf32, #tpu.memory_space<vmem>>, vector<1x8x32xf32>
    %181 = vector.shape_cast %180 : vector<1x8x32xf32> to vector<8x32xf32>
    %c0_78 = arith.constant 0 : index
    %c0_79 = arith.constant 0 : index
    %182 = vector.load %arg18[%c0_78, %c0_79] : memref<64x128xf32, #tpu.memory_space<vmem>>, vector<8x128xf32>
    %cst_80 = arith.constant dense<0.000000e+00> : vector<8x128xf32>
    %183 = tpu.matmul %179, %177, %cst_80 {dimension_numbers = #tpu.dot_dimension_numbers<[1], [0], [0], [1], [0, 0, 1, 1], [], []>} : vector<8x32xf32>, vector<32x128xf32>, vector<8x128xf32> -> vector<8x128xf32>
    %184 = arith.addf %182, %183 : vector<8x128xf32>
    %185 = arith.negf %184 : vector<8x128xf32>
    %186 = math.exp %185 : vector<8x128xf32>
    %cst_81 = arith.constant 1.000000e+00 : f32
    %187 = vector.broadcast %cst_81 : f32 to vector<8x128xf32>
    %188 = arith.addf %187, %186 : vector<8x128xf32>
    %189 = arith.divf %187, %188 : vector<8x128xf32>
    %190 = math.tanh %184 : vector<8x128xf32>
    %191 = vector.extract_strided_slice %189 {offsets = [0, 0], sizes = [8, 32], strides = [1, 1]} : vector<8x128xf32> to vector<8x32xf32>
    %192 = vector.extract_strided_slice %189 {offsets = [0, 32], sizes = [8, 32], strides = [1, 1]} : vector<8x128xf32> to vector<8x32xf32>
    %193 = vector.extract_strided_slice %190 {offsets = [0, 64], sizes = [8, 32], strides = [1, 1]} : vector<8x128xf32> to vector<8x32xf32>
    %194 = vector.extract_strided_slice %189 {offsets = [0, 96], sizes = [8, 32], strides = [1, 1]} : vector<8x128xf32> to vector<8x32xf32>
    %195 = arith.mulf %192, %181 : vector<8x32xf32>
    %196 = arith.mulf %191, %193 : vector<8x32xf32>
    %197 = arith.addf %195, %196 : vector<8x32xf32>
    %198 = math.tanh %197 : vector<8x32xf32>
    %199 = arith.mulf %194, %198 : vector<8x32xf32>
    %c8_82 = arith.constant 8 : index
    %c0_83 = arith.constant 0 : index
    %200 = vector.load %arg18[%c8_82, %c0_83] : memref<64x128xf32, #tpu.memory_space<vmem>>, vector<8x128xf32>
    %cst_84 = arith.constant dense<0.000000e+00> : vector<8x128xf32>
    %201 = tpu.matmul %199, %177, %cst_84 {dimension_numbers = #tpu.dot_dimension_numbers<[1], [0], [0], [1], [0, 0, 1, 1], [], []>} : vector<8x32xf32>, vector<32x128xf32>, vector<8x128xf32> -> vector<8x128xf32>
    %202 = arith.addf %200, %201 : vector<8x128xf32>
    %203 = arith.negf %202 : vector<8x128xf32>
    %204 = math.exp %203 : vector<8x128xf32>
    %cst_85 = arith.constant 1.000000e+00 : f32
    %205 = vector.broadcast %cst_85 : f32 to vector<8x128xf32>
    %206 = arith.addf %205, %204 : vector<8x128xf32>
    %207 = arith.divf %205, %206 : vector<8x128xf32>
    %208 = math.tanh %202 : vector<8x128xf32>
    %209 = vector.extract_strided_slice %207 {offsets = [0, 0], sizes = [8, 32], strides = [1, 1]} : vector<8x128xf32> to vector<8x32xf32>
    %210 = vector.extract_strided_slice %207 {offsets = [0, 32], sizes = [8, 32], strides = [1, 1]} : vector<8x128xf32> to vector<8x32xf32>
    %211 = vector.extract_strided_slice %208 {offsets = [0, 64], sizes = [8, 32], strides = [1, 1]} : vector<8x128xf32> to vector<8x32xf32>
    %212 = vector.extract_strided_slice %207 {offsets = [0, 96], sizes = [8, 32], strides = [1, 1]} : vector<8x128xf32> to vector<8x32xf32>
    %213 = arith.mulf %210, %197 : vector<8x32xf32>
    %214 = arith.mulf %209, %211 : vector<8x32xf32>
    %215 = arith.addf %213, %214 : vector<8x32xf32>
    %216 = math.tanh %215 : vector<8x32xf32>
    %217 = arith.mulf %212, %216 : vector<8x32xf32>
    %c16_86 = arith.constant 16 : index
    %c0_87 = arith.constant 0 : index
    %218 = vector.load %arg18[%c16_86, %c0_87] : memref<64x128xf32, #tpu.memory_space<vmem>>, vector<8x128xf32>
    %cst_88 = arith.constant dense<0.000000e+00> : vector<8x128xf32>
    %219 = tpu.matmul %217, %177, %cst_88 {dimension_numbers = #tpu.dot_dimension_numbers<[1], [0], [0], [1], [0, 0, 1, 1], [], []>} : vector<8x32xf32>, vector<32x128xf32>, vector<8x128xf32> -> vector<8x128xf32>
    %220 = arith.addf %218, %219 : vector<8x128xf32>
    %221 = arith.negf %220 : vector<8x128xf32>
    %222 = math.exp %221 : vector<8x128xf32>
    %cst_89 = arith.constant 1.000000e+00 : f32
    %223 = vector.broadcast %cst_89 : f32 to vector<8x128xf32>
    %224 = arith.addf %223, %222 : vector<8x128xf32>
    %225 = arith.divf %223, %224 : vector<8x128xf32>
    %226 = math.tanh %220 : vector<8x128xf32>
    %227 = vector.extract_strided_slice %225 {offsets = [0, 0], sizes = [8, 32], strides = [1, 1]} : vector<8x128xf32> to vector<8x32xf32>
    %228 = vector.extract_strided_slice %225 {offsets = [0, 32], sizes = [8, 32], strides = [1, 1]} : vector<8x128xf32> to vector<8x32xf32>
    %229 = vector.extract_strided_slice %226 {offsets = [0, 64], sizes = [8, 32], strides = [1, 1]} : vector<8x128xf32> to vector<8x32xf32>
    %230 = vector.extract_strided_slice %225 {offsets = [0, 96], sizes = [8, 32], strides = [1, 1]} : vector<8x128xf32> to vector<8x32xf32>
    %231 = arith.mulf %228, %215 : vector<8x32xf32>
    %232 = arith.mulf %227, %229 : vector<8x32xf32>
    %233 = arith.addf %231, %232 : vector<8x32xf32>
    %234 = math.tanh %233 : vector<8x32xf32>
    %235 = arith.mulf %230, %234 : vector<8x32xf32>
    %c24_90 = arith.constant 24 : index
    %c0_91 = arith.constant 0 : index
    %236 = vector.load %arg18[%c24_90, %c0_91] : memref<64x128xf32, #tpu.memory_space<vmem>>, vector<8x128xf32>
    %cst_92 = arith.constant dense<0.000000e+00> : vector<8x128xf32>
    %237 = tpu.matmul %235, %177, %cst_92 {dimension_numbers = #tpu.dot_dimension_numbers<[1], [0], [0], [1], [0, 0, 1, 1], [], []>} : vector<8x32xf32>, vector<32x128xf32>, vector<8x128xf32> -> vector<8x128xf32>
    %238 = arith.addf %236, %237 : vector<8x128xf32>
    %239 = arith.negf %238 : vector<8x128xf32>
    %240 = math.exp %239 : vector<8x128xf32>
    %cst_93 = arith.constant 1.000000e+00 : f32
    %241 = vector.broadcast %cst_93 : f32 to vector<8x128xf32>
    %242 = arith.addf %241, %240 : vector<8x128xf32>
    %243 = arith.divf %241, %242 : vector<8x128xf32>
    %244 = math.tanh %238 : vector<8x128xf32>
    %245 = vector.extract_strided_slice %243 {offsets = [0, 0], sizes = [8, 32], strides = [1, 1]} : vector<8x128xf32> to vector<8x32xf32>
    %246 = vector.extract_strided_slice %243 {offsets = [0, 32], sizes = [8, 32], strides = [1, 1]} : vector<8x128xf32> to vector<8x32xf32>
    %247 = vector.extract_strided_slice %244 {offsets = [0, 64], sizes = [8, 32], strides = [1, 1]} : vector<8x128xf32> to vector<8x32xf32>
    %248 = vector.extract_strided_slice %243 {offsets = [0, 96], sizes = [8, 32], strides = [1, 1]} : vector<8x128xf32> to vector<8x32xf32>
    %249 = arith.mulf %246, %233 : vector<8x32xf32>
    %250 = arith.mulf %245, %247 : vector<8x32xf32>
    %251 = arith.addf %249, %250 : vector<8x32xf32>
    %252 = math.tanh %251 : vector<8x32xf32>
    %253 = arith.mulf %248, %252 : vector<8x32xf32>
    %c32_94 = arith.constant 32 : index
    %c0_95 = arith.constant 0 : index
    %254 = vector.load %arg18[%c32_94, %c0_95] : memref<64x128xf32, #tpu.memory_space<vmem>>, vector<8x128xf32>
    %cst_96 = arith.constant dense<0.000000e+00> : vector<8x128xf32>
    %255 = tpu.matmul %253, %177, %cst_96 {dimension_numbers = #tpu.dot_dimension_numbers<[1], [0], [0], [1], [0, 0, 1, 1], [], []>} : vector<8x32xf32>, vector<32x128xf32>, vector<8x128xf32> -> vector<8x128xf32>
    %256 = arith.addf %254, %255 : vector<8x128xf32>
    %257 = arith.negf %256 : vector<8x128xf32>
    %258 = math.exp %257 : vector<8x128xf32>
    %cst_97 = arith.constant 1.000000e+00 : f32
    %259 = vector.broadcast %cst_97 : f32 to vector<8x128xf32>
    %260 = arith.addf %259, %258 : vector<8x128xf32>
    %261 = arith.divf %259, %260 : vector<8x128xf32>
    %262 = math.tanh %256 : vector<8x128xf32>
    %263 = vector.extract_strided_slice %261 {offsets = [0, 0], sizes = [8, 32], strides = [1, 1]} : vector<8x128xf32> to vector<8x32xf32>
    %264 = vector.extract_strided_slice %261 {offsets = [0, 32], sizes = [8, 32], strides = [1, 1]} : vector<8x128xf32> to vector<8x32xf32>
    %265 = vector.extract_strided_slice %262 {offsets = [0, 64], sizes = [8, 32], strides = [1, 1]} : vector<8x128xf32> to vector<8x32xf32>
    %266 = vector.extract_strided_slice %261 {offsets = [0, 96], sizes = [8, 32], strides = [1, 1]} : vector<8x128xf32> to vector<8x32xf32>
    %267 = arith.mulf %264, %251 : vector<8x32xf32>
    %268 = arith.mulf %263, %265 : vector<8x32xf32>
    %269 = arith.addf %267, %268 : vector<8x32xf32>
    %270 = math.tanh %269 : vector<8x32xf32>
    %271 = arith.mulf %266, %270 : vector<8x32xf32>
    %c40_98 = arith.constant 40 : index
    %c0_99 = arith.constant 0 : index
    %272 = vector.load %arg18[%c40_98, %c0_99] : memref<64x128xf32, #tpu.memory_space<vmem>>, vector<8x128xf32>
    %cst_100 = arith.constant dense<0.000000e+00> : vector<8x128xf32>
    %273 = tpu.matmul %271, %177, %cst_100 {dimension_numbers = #tpu.dot_dimension_numbers<[1], [0], [0], [1], [0, 0, 1, 1], [], []>} : vector<8x32xf32>, vector<32x128xf32>, vector<8x128xf32> -> vector<8x128xf32>
    %274 = arith.addf %272, %273 : vector<8x128xf32>
    %275 = arith.negf %274 : vector<8x128xf32>
    %276 = math.exp %275 : vector<8x128xf32>
    %cst_101 = arith.constant 1.000000e+00 : f32
    %277 = vector.broadcast %cst_101 : f32 to vector<8x128xf32>
    %278 = arith.addf %277, %276 : vector<8x128xf32>
    %279 = arith.divf %277, %278 : vector<8x128xf32>
    %280 = math.tanh %274 : vector<8x128xf32>
    %281 = vector.extract_strided_slice %279 {offsets = [0, 0], sizes = [8, 32], strides = [1, 1]} : vector<8x128xf32> to vector<8x32xf32>
    %282 = vector.extract_strided_slice %279 {offsets = [0, 32], sizes = [8, 32], strides = [1, 1]} : vector<8x128xf32> to vector<8x32xf32>
    %283 = vector.extract_strided_slice %280 {offsets = [0, 64], sizes = [8, 32], strides = [1, 1]} : vector<8x128xf32> to vector<8x32xf32>
    %284 = vector.extract_strided_slice %279 {offsets = [0, 96], sizes = [8, 32], strides = [1, 1]} : vector<8x128xf32> to vector<8x32xf32>
    %285 = arith.mulf %282, %269 : vector<8x32xf32>
    %286 = arith.mulf %281, %283 : vector<8x32xf32>
    %287 = arith.addf %285, %286 : vector<8x32xf32>
    %288 = math.tanh %287 : vector<8x32xf32>
    %289 = arith.mulf %284, %288 : vector<8x32xf32>
    %c48_102 = arith.constant 48 : index
    %c0_103 = arith.constant 0 : index
    %290 = vector.load %arg18[%c48_102, %c0_103] : memref<64x128xf32, #tpu.memory_space<vmem>>, vector<8x128xf32>
    %cst_104 = arith.constant dense<0.000000e+00> : vector<8x128xf32>
    %291 = tpu.matmul %289, %177, %cst_104 {dimension_numbers = #tpu.dot_dimension_numbers<[1], [0], [0], [1], [0, 0, 1, 1], [], []>} : vector<8x32xf32>, vector<32x128xf32>, vector<8x128xf32> -> vector<8x128xf32>
    %292 = arith.addf %290, %291 : vector<8x128xf32>
    %293 = arith.negf %292 : vector<8x128xf32>
    %294 = math.exp %293 : vector<8x128xf32>
    %cst_105 = arith.constant 1.000000e+00 : f32
    %295 = vector.broadcast %cst_105 : f32 to vector<8x128xf32>
    %296 = arith.addf %295, %294 : vector<8x128xf32>
    %297 = arith.divf %295, %296 : vector<8x128xf32>
    %298 = math.tanh %292 : vector<8x128xf32>
    %299 = vector.extract_strided_slice %297 {offsets = [0, 0], sizes = [8, 32], strides = [1, 1]} : vector<8x128xf32> to vector<8x32xf32>
    %300 = vector.extract_strided_slice %297 {offsets = [0, 32], sizes = [8, 32], strides = [1, 1]} : vector<8x128xf32> to vector<8x32xf32>
    %301 = vector.extract_strided_slice %298 {offsets = [0, 64], sizes = [8, 32], strides = [1, 1]} : vector<8x128xf32> to vector<8x32xf32>
    %302 = vector.extract_strided_slice %297 {offsets = [0, 96], sizes = [8, 32], strides = [1, 1]} : vector<8x128xf32> to vector<8x32xf32>
    %303 = arith.mulf %300, %287 : vector<8x32xf32>
    %304 = arith.mulf %299, %301 : vector<8x32xf32>
    %305 = arith.addf %303, %304 : vector<8x32xf32>
    %306 = math.tanh %305 : vector<8x32xf32>
    %307 = arith.mulf %302, %306 : vector<8x32xf32>
    %c56_106 = arith.constant 56 : index
    %c0_107 = arith.constant 0 : index
    %308 = vector.load %arg18[%c56_106, %c0_107] : memref<64x128xf32, #tpu.memory_space<vmem>>, vector<8x128xf32>
    %cst_108 = arith.constant dense<0.000000e+00> : vector<8x128xf32>
    %309 = tpu.matmul %307, %177, %cst_108 {dimension_numbers = #tpu.dot_dimension_numbers<[1], [0], [0], [1], [0, 0, 1, 1], [], []>} : vector<8x32xf32>, vector<32x128xf32>, vector<8x128xf32> -> vector<8x128xf32>
    %310 = arith.addf %308, %309 : vector<8x128xf32>
    %311 = arith.negf %310 : vector<8x128xf32>
    %312 = math.exp %311 : vector<8x128xf32>
    %cst_109 = arith.constant 1.000000e+00 : f32
    %313 = vector.broadcast %cst_109 : f32 to vector<8x128xf32>
    %314 = arith.addf %313, %312 : vector<8x128xf32>
    %315 = arith.divf %313, %314 : vector<8x128xf32>
    %316 = math.tanh %310 : vector<8x128xf32>
    %317 = vector.extract_strided_slice %315 {offsets = [0, 0], sizes = [8, 32], strides = [1, 1]} : vector<8x128xf32> to vector<8x32xf32>
    %318 = vector.extract_strided_slice %315 {offsets = [0, 32], sizes = [8, 32], strides = [1, 1]} : vector<8x128xf32> to vector<8x32xf32>
    %319 = vector.extract_strided_slice %316 {offsets = [0, 64], sizes = [8, 32], strides = [1, 1]} : vector<8x128xf32> to vector<8x32xf32>
    %320 = vector.extract_strided_slice %315 {offsets = [0, 96], sizes = [8, 32], strides = [1, 1]} : vector<8x128xf32> to vector<8x32xf32>
    %321 = arith.mulf %318, %305 : vector<8x32xf32>
    %322 = arith.mulf %317, %319 : vector<8x32xf32>
    %323 = arith.addf %321, %322 : vector<8x32xf32>
    %324 = math.tanh %323 : vector<8x32xf32>
    %325 = arith.mulf %320, %324 : vector<8x32xf32>
    %c1_110 = arith.constant 1 : index
    %c0_111 = arith.constant 0 : index
    %c0_112 = arith.constant 0 : index
    %326 = vector.load %arg15[%c1_110, %c0_111, %c0_112] : memref<2x8x32xf32, #tpu.memory_space<vmem>>, vector<1x8x32xf32>
    %327 = vector.shape_cast %326 : vector<1x8x32xf32> to vector<8x32xf32>
    %328 = vector.shape_cast %325 : vector<8x32xf32> to vector<1x8x32xf32>
    tpu.vector_store %arg15[%c1_110, %c0_111, %c0_112], %328 {strides = array<i32>} : memref<2x8x32xf32, #tpu.memory_space<vmem>>, vector<1x8x32xf32>,
    %c1_113 = arith.constant 1 : index
    %c0_114 = arith.constant 0 : index
    %c0_115 = arith.constant 0 : index
    %329 = vector.load %arg16[%c1_113, %c0_114, %c0_115] : memref<2x8x32xf32, #tpu.memory_space<vmem>>, vector<1x8x32xf32>
    %330 = vector.shape_cast %329 : vector<1x8x32xf32> to vector<8x32xf32>
    %331 = vector.shape_cast %323 : vector<8x32xf32> to vector<1x8x32xf32>
    tpu.vector_store %arg16[%c1_113, %c0_114, %c0_115], %331 {strides = array<i32>} : memref<2x8x32xf32, #tpu.memory_space<vmem>>, vector<1x8x32xf32>,
    %c0_116 = arith.constant 0 : index
    %c0_117 = arith.constant 0 : index
    %332 = vector.load %arg9[%c0_116, %c0_117] : memref<32x16xf32, #tpu.memory_space<vmem>>, vector<32x16xf32>
    %cst_118 = arith.constant dense<0.000000e+00> : vector<8x16xf32>
    %333 = tpu.matmul %325, %332, %cst_118 {dimension_numbers = #tpu.dot_dimension_numbers<[1], [0], [0], [1], [0, 0, 1, 1], [], []>} : vector<8x32xf32>, vector<32x16xf32>, vector<8x16xf32> -> vector<8x16xf32>
    %c0_119 = arith.constant 0 : index
    %c0_120 = arith.constant 0 : index
    %334 = vector.load %arg10[%c0_119, %c0_120] : memref<1x16xf32, #tpu.memory_space<vmem>>, vector<1x16xf32>
    %335 = vector.broadcast %334 : vector<1x16xf32> to vector<8x16xf32>
    %336 = arith.addf %333, %335 : vector<8x16xf32>
    %337 = math.tanh %336 : vector<8x16xf32>
    %c0_121 = arith.constant 0 : index
    %c0_122 = arith.constant 0 : index
    %338 = vector.load %arg13[%c0_121, %c0_122] : memref<8x16xf32, #tpu.memory_space<vmem>>, vector<8x16xf32>
    %339 = arith.mulf %337, %338 : vector<8x16xf32>
    %c0_123 = arith.constant 0 : index
    %c0_124 = arith.constant 0 : index
    %340 = vector.load %arg11[%c0_123, %c0_124] : memref<1x16xf32, #tpu.memory_space<vmem>>, vector<1x16xf32>
    %341 = vector.broadcast %340 : vector<1x16xf32> to vector<8x16xf32>
    %342 = arith.mulf %339, %341 : vector<8x16xf32>
    %cst_125 = arith.constant dense<0.000000e+00> : vector<8xf32>
    %343 = vector.multi_reduction <add>, %342, %cst_125 [1] : vector<8x16xf32> to vector<8xf32>
    %344 = vector.shape_cast %343 : vector<8xf32> to vector<8x1xf32>
    %c0_126 = arith.constant 0 : index
    %c0_127 = arith.constant 0 : index
    %345 = vector.load %arg12[%c0_126, %c0_127] : memref<1x1xf32, #tpu.memory_space<vmem>>, vector<1x1xf32>
    %346 = vector.broadcast %345 : vector<1x1xf32> to vector<8x1xf32>
    %347 = arith.addf %344, %346 : vector<8x1xf32>
    %c0_128 = arith.constant 0 : index
    %c0_129 = arith.constant 0 : index
    %348 = vector.load %arg14[%c0_128, %c0_129] : memref<8x1xf32, #tpu.memory_space<vmem>>, vector<8x1xf32>
    tpu.vector_store %arg14[%c0_128, %c0_129], %347 {strides = array<i32>} : memref<8x1xf32, #tpu.memory_space<vmem>>, vector<8x1xf32>,
    return
  }
}

</mosaic_0001>

<llo_original>
// kernel: rnn_predictor_forward.1
$region0: #{rnn_predictor_forward.1}
  #allocation0 [shape = 'u32[]', space=smem, size = 0x4, offset = 0x4, fixed_abs, tag = 'smem constant byte address 0x4 - core index']
  #allocation1 [shape = 'u32[144,128]{1,0:T(1,128)}', space=vmem, size = 0x12000, scoped, tag = 'internal scratch']
  #allocation2 [shape = 'f32[64,32]{1,0:T(8,128)}', space=vmem, size = 0x8000, scoped, tag = 'scratch operand']
  #allocation3 [shape = 'f32[64,128]{1,0:T(8,128)}', space=vmem, size = 0x8000, scoped, tag = 'scratch operand']
  #allocation4 [shape = 'f32[1,1]{1,0:T(1,128)S(1)}', space=vmem, size = 0x200, scoped, tag = 'scoped memory for rnn_predictor_forward.1']
  %s0 = inlined_call_operand.vmem [shape: f32[64,16], index: 0, kind: input, shape index: {}]
  %s1 = inlined_call_operand.vmem [shape: f32[16,128], index: 1, kind: input, shape index: {}]
  %s2 = inlined_call_operand.vmem [shape: f32[32,128], index: 2, kind: input, shape index: {}]
  %s3 = inlined_call_operand.vmem [shape: f32[1,128], index: 3, kind: input, shape index: {}]
  %s4 = inlined_call_operand.vmem [shape: f32[32,128], index: 4, kind: input, shape index: {}]
  %s5 = inlined_call_operand.vmem [shape: f32[32,128], index: 5, kind: input, shape index: {}]
  %s6 = inlined_call_operand.vmem [shape: f32[1,128], index: 6, kind: input, shape index: {}]
  %s7 = inlined_call_operand.vmem [shape: f32[2,8,32], index: 7, kind: input, shape index: {}]
  %s8 = inlined_call_operand.vmem [shape: f32[2,8,32], index: 8, kind: input, shape index: {}]
  %s9 = inlined_call_operand.vmem [shape: f32[32,16], index: 9, kind: input, shape index: {}]
  %s10 = inlined_call_operand.vmem [shape: f32[1,16], index: 10, kind: input, shape index: {}]
  %s11 = inlined_call_operand.vmem [shape: f32[1,16], index: 11, kind: input, shape index: {}]
  %s12 = inlined_call_operand.<no memory space> [shape: f32[1,1], index: 12, kind: input, shape index: {}]
  %s13 = inlined_call_operand.vmem [shape: f32[8,16], index: 13, kind: input, shape index: {}]
  %s14 = inlined_call_operand.vmem [shape: f32[8,1], index: 14, kind: output, shape index: {0}]
  %s15 = inlined_call_operand.vmem [shape: f32[2,8,32], index: 15, kind: output, shape index: {1}]
  %s16 = inlined_call_operand.vmem [shape: f32[2,8,32], index: 16, kind: output, shape index: {2}]
  %17 = xla_tuple %s14, %s15, %s16
  %s18 = sld [smem:[#allocation0]]
  $region82: #{rnn_predictor_forward.1} parent=0
    _
  %s20 = ssub.s32 1, %s18
  %s21 = scalar_select 0, %s20, %s18
  %v22 = vstv %s12
  %23 = vst [vmem:[#allocation4] sm:$0x1] %v22
  // Predicated region
  $region2: #{rnn_predictor_forward.1} parent=0 // pred_check
    _
  $region3: #{rnn_predictor_forward.1} parent=0 // pred_check_branch
    %25 = sbr.rel (0) target = $region5
  $region4: #{rnn_predictor_forward.1} parent=0 // pred_region
    _
  $region5: #{rnn_predictor_forward.1} parent=0 // pred_fallthru
    _
  // Predicated region
  $region6: #{rnn_predictor_forward.1} parent=0 // pred_check
    _
  $region7: #{rnn_predictor_forward.1} parent=0 // pred_check_branch
    %27 = sbr.rel (0) target = $region9
  $region8: #{rnn_predictor_forward.1} parent=0 // pred_region
    _
  $region9: #{rnn_predictor_forward.1} parent=0 // pred_fallthru
    _
  // Predicated region
  $region10: #{rnn_predictor_forward.1} parent=0 // pred_check
    _
  $region11: #{rnn_predictor_forward.1} parent=0 // pred_check_branch
    %29 = sbr.rel (0) target = $region13
  $region12: #{rnn_predictor_forward.1} parent=0 // pred_region
    _
  $region13: #{rnn_predictor_forward.1} parent=0 // pred_fallthru
    _
  // Predicated region
  $region14: #{rnn_predictor_forward.1} parent=0 // pred_check
    _
  $region15: #{rnn_predictor_forward.1} parent=0 // pred_check_branch
    %31 = sbr.rel (0) target = $region17
  $region16: #{rnn_predictor_forward.1} parent=0 // pred_region
    _
  $region17: #{rnn_predictor_forward.1} parent=0 // pred_fallthru
    _
  // Predicated region
  $region18: #{rnn_predictor_forward.1} parent=0 // pred_check
    _
  $region19: #{rnn_predictor_forward.1} parent=0 // pred_check_branch
    %33 = sbr.rel (0) target = $region21
  $region20: #{rnn_predictor_forward.1} parent=0 // pred_region
    _
  $region21: #{rnn_predictor_forward.1} parent=0 // pred_fallthru
    _
  // Predicated region
  $region22: #{rnn_predictor_forward.1} parent=0 // pred_check
    _
  $region23: #{rnn_predictor_forward.1} parent=0 // pred_check_branch
    %35 = sbr.rel (0) target = $region25
  $region24: #{rnn_predictor_forward.1} parent=0 // pred_region
    _
  $region25: #{rnn_predictor_forward.1} parent=0 // pred_fallthru
    _
  // Predicated region
  $region26: #{rnn_predictor_forward.1} parent=0 // pred_check
    _
  $region27: #{rnn_predictor_forward.1} parent=0 // pred_check_branch
    %37 = sbr.rel (0) target = $region29
  $region28: #{rnn_predictor_forward.1} parent=0 // pred_region
    _
  $region29: #{rnn_predictor_forward.1} parent=0 // pred_fallthru
    _
  // Predicated region
  $region30: #{rnn_predictor_forward.1} parent=0 // pred_check
    _
  $region31: #{rnn_predictor_forward.1} parent=0 // pred_check_branch
    %39 = sbr.rel (0) target = $region33
  $region32: #{rnn_predictor_forward.1} parent=0 // pred_region
    _
  $region33: #{rnn_predictor_forward.1} parent=0 // pred_fallthru
    _
  // Predicated region
  $region34: #{rnn_predictor_forward.1} parent=0 // pred_check
    _
  $region35: #{rnn_predictor_forward.1} parent=0 // pred_check_branch
    %41 = sbr.rel (0) target = $region37
  $region36: #{rnn_predictor_forward.1} parent=0 // pred_region
    _
  $region37: #{rnn_predictor_forward.1} parent=0 // pred_fallthru
    _
  // Predicated region
  $region38: #{rnn_predictor_forward.1} parent=0 // pred_check
    _
  $region39: #{rnn_predictor_forward.1} parent=0 // pred_check_branch
    %43 = sbr.rel (0) target = $region41
  $region40: #{rnn_predictor_forward.1} parent=0 // pred_region
    _
  $region41: #{rnn_predictor_forward.1} parent=0 // pred_fallthru
    _
  // Predicated region
  $region42: #{rnn_predictor_forward.1} parent=0 // pred_check
    _
  $region43: #{rnn_predictor_forward.1} parent=0 // pred_check_branch
    %45 = sbr.rel (0) target = $region45
  $region44: #{rnn_predictor_forward.1} parent=0 // pred_region
    _
  $region45: #{rnn_predictor_forward.1} parent=0 // pred_fallthru
    _
  // Predicated region
  $region46: #{rnn_predictor_forward.1} parent=0 // pred_check
    _
  $region47: #{rnn_predictor_forward.1} parent=0 // pred_check_branch
    %47 = sbr.rel (0) target = $region49
  $region48: #{rnn_predictor_forward.1} parent=0 // pred_region
    _
  $region49: #{rnn_predictor_forward.1} parent=0 // pred_fallthru
    _
  // Predicated region
  $region50: #{rnn_predictor_forward.1} parent=0 // pred_check
    _
  $region51: #{rnn_predictor_forward.1} parent=0 // pred_check_branch
    %49 = sbr.rel (0) target = $region53
  $region52: #{rnn_predictor_forward.1} parent=0 // pred_region
    _
  $region53: #{rnn_predictor_forward.1} parent=0 // pred_fallthru
    _
  // Predicated region
  $region54: #{rnn_predictor_forward.1} parent=0 // pred_check
    _
  $region55: #{rnn_predictor_forward.1} parent=0 // pred_check_branch
    %51 = sbr.rel (0) target = $region57
  $region56: #{rnn_predictor_forward.1} parent=0 // pred_region
    _
  $region57: #{rnn_predictor_forward.1} parent=0 // pred_fallthru
    _
  %v52 = vld [vmem:[%s0] sm:$0xff]
  %v53 = vld [vmem:[%s0 + $0x8] sm:$0xff]
  %v54 = vld [vmem:[%s0 + $0x10] sm:$0xff]
  %v55 = vld [vmem:[%s0 + $0x18] sm:$0xff]
  %v56 = vld [vmem:[%s0 + $0x20] sm:$0xff]
  %v57 = vld [vmem:[%s0 + $0x28] sm:$0xff]
  %v58 = vld [vmem:[%s0 + $0x30] sm:$0xff]
  %v59 = vld [vmem:[%s0 + $0x38] sm:$0xff]
  %v60 = vld [vmem:[%s1] sm:$0xff]
  %v61 = vld [vmem:[%s1 + $0x8] sm:$0xff]
  %v62 = vld [vmem:[%s3] sm:$0x1]
  %v64 = vlaneseq
  %v65 = vshrl.u32 %v64, 7
  %v66 = vsub.s32 0, %v65
  %v67 = vrot.slane %v62, %v66
  %vm69 = vcmask 130048
  %v71 = vsel %vm69, %v52, 0
  %v74 = vsel %vm69, %v53, 0
  %v77 = vsel %vm69, %v54, 0
  %v80 = vsel %vm69, %v55, 0
  %v83 = vsel %vm69, %v56, 0
  %v86 = vsel %vm69, %v57, 0
  %v89 = vsel %vm69, %v58, 0
  %v92 = vsel %vm69, %v59, 0
  %94 = vmatprep.subr.mxu0 0.0
  %95 = vmatpush1.msra.mxu0 %v60
  %96 = vmatprep.subr.mxu0 0.0
  %97 = vmatpush1.msra.mxu0 %v61
  %98 = vmatprep.subr.mxu0 0.0
  %99 = vmatpush1.msra.mxu0 0.0
  %100 = vmatprep.subr.mxu0 0.0
  %101 = vmatpush1.msra.mxu0 0.0
  %102 = vmatprep.subr.mxu0 0.0
  %103 = vmatpush1.msra.mxu0 0.0
  %104 = vmatprep.subr.mxu0 0.0
  %105 = vmatpush1.msra.mxu0 0.0
  %106 = vmatprep.subr.mxu0 0.0
  %107 = vmatpush1.msra.mxu0 0.0
  %108 = vmatprep.subr.mxu0 0.0
  %109 = vmatpush1.msra.mxu0 0.0
  %110 = vmatprep.subr.mxu0 0.0
  %111 = vmatpush1.msra.mxu0 0.0
  %112 = vmatprep.subr.mxu0 0.0
  %113 = vmatpush1.msra.mxu0 0.0
  %114 = vmatprep.subr.mxu0 0.0
  %115 = vmatpush1.msra.mxu0 0.0
  %116 = vmatprep.subr.mxu0 0.0
  %117 = vmatpush1.msra.mxu0 0.0
  %118 = vmatprep.subr.mxu0 0.0
  %119 = vmatpush1.msra.mxu0 0.0
  %120 = vmatprep.subr.mxu0 0.0
  %121 = vmatpush1.msra.mxu0 0.0
  %122 = vmatprep.subr.mxu0 0.0
  %123 = vmatpush1.msra.mxu0 0.0
  %124 = vmatprep.subr.mxu0 0.0
  %125 = vmatpush1.msra.mxu0 0.0
  %126 = vmatprep.subr.mxu0 0.0
  %127 = vmatpush1.msra.mxu0 0.0
  %128 = vmatprep.subr.mxu0 0.0
  %129 = vmatpush1.msra.mxu0 0.0
  %130 = vmatprep.subr.mxu0 0.0
  %131 = vmatpush1.msra.mxu0 0.0
  %132 = vmatprep.subr.mxu0 0.0
  %133 = vmatpush1.msra.mxu0 0.0
  %134 = vmatprep.subr.mxu0 0.0
  %135 = vmatpush1.msra.mxu0 0.0
  %136 = vmatprep.subr.mxu0 0.0
  %137 = vmatpush1.msra.mxu0 0.0
  %138 = vmatprep.subr.mxu0 0.0
  %139 = vmatpush1.msra.mxu0 0.0
  %140 = vmatprep.subr.mxu0 0.0
  %141 = vmatpush1.msra.mxu0 0.0
  %142 = vmatprep.subr.mxu0 0.0
  %143 = vmatpush1.msra.mxu0 0.0
  %144 = vmatprep.subr.mxu0 0.0
  %145 = vmatpush1.msra.mxu0 0.0
  %146 = vmatprep.subr.mxu0 0.0
  %147 = vmatpush1.msra.mxu0 0.0
  %148 = vmatprep.subr.mxu0 0.0
  %149 = vmatpush1.msra.mxu0 0.0
  %150 = vmatprep.subr.mxu0 0.0
  %151 = vmatpush1.msra.mxu0 0.0
  %152 = vmatprep.subr.mxu0 0.0
  %153 = vmatpush1.msra.mxu0 0.0
  %154 = vmatprep.subr.mxu0 0.0
  %155 = vmatpush1.msra.mxu0 0.0
  %156 = vmatprep.subr.mxu0 0.0
  %157 = vmatpush1.msra.mxu0 0.0
  %158 = vmatprep.mubr.f32.mxu0 0.0
  %159 = vmatmul.mubr.f32.gmra.mrb[0].mxu0 %v71
  %v160 = vpop.f32.mrb[0].mxu0
  %v161 = vadd.f32 %v67, %v160
  %v162 = vpop.f32.mrb[0].mxu0
  %163 = vmatprep.mubr.f32.mxu0 0.0
  %164 = vmatmul.mubr.f32.gmra.mrb[0].mxu0 %v74
  %v165 = vpop.f32.mrb[0].mxu0
  %v166 = vadd.f32 %v67, %v165
  %v167 = vpop.f32.mrb[0].mxu0
  %168 = vmatprep.mubr.f32.mxu0 0.0
  %169 = vmatmul.mubr.f32.gmra.mrb[0].mxu0 %v77
  %v170 = vpop.f32.mrb[0].mxu0
  %v171 = vadd.f32 %v67, %v170
  %v172 = vpop.f32.mrb[0].mxu0
  %173 = vmatprep.mubr.f32.mxu0 0.0
  %174 = vmatmul.mubr.f32.gmra.mrb[0].mxu0 %v80
  %v175 = vpop.f32.mrb[0].mxu0
  %v176 = vadd.f32 %v67, %v175
  %v177 = vpop.f32.mrb[0].mxu0
  %178 = vmatprep.mubr.f32.mxu0 0.0
  %179 = vmatmul.mubr.f32.gmra.mrb[0].mxu0 %v83
  %v180 = vpop.f32.mrb[0].mxu0
  %v181 = vadd.f32 %v67, %v180
  %v182 = vpop.f32.mrb[0].mxu0
  %183 = vmatprep.mubr.f32.mxu0 0.0
  %184 = vmatmul.mubr.f32.gmra.mrb[0].mxu0 %v86
  %v185 = vpop.f32.mrb[0].mxu0
  %v186 = vadd.f32 %v67, %v185
  %v187 = vpop.f32.mrb[0].mxu0
  %188 = vmatprep.mubr.f32.mxu0 0.0
  %189 = vmatmul.mubr.f32.gmra.mrb[0].mxu0 %v89
  %v190 = vpop.f32.mrb[0].mxu0
  %v191 = vadd.f32 %v67, %v190
  %v192 = vpop.f32.mrb[0].mxu0
  %193 = vmatprep.mubr.f32.mxu0 0.0
  %194 = vmatmul.mubr.f32.gmra.mrb[0].mxu0 %v92
  %v195 = vpop.f32.mrb[0].mxu0
  %v196 = vadd.f32 %v67, %v195
  %v197 = vpop.f32.mrb[0].mxu0
  %198 = vdwg.mxu0
  %199 = vst [vmem:[#allocation3] sm:$0xff] %v161
  %200 = vst [vmem:[#allocation3 + $0x8] sm:$0xff] %v166
  %201 = vst [vmem:[#allocation3 + $0x10] sm:$0xff] %v171
  %202 = vst [vmem:[#allocation3 + $0x18] sm:$0xff] %v176
  %203 = vst [vmem:[#allocation3 + $0x20] sm:$0xff] %v181
  %204 = vst [vmem:[#allocation3 + $0x28] sm:$0xff] %v186
  %205 = vst [vmem:[#allocation3 + $0x30] sm:$0xff] %v191
  %206 = vst [vmem:[#allocation3 + $0x38] sm:$0xff] %v196
  %v207 = vld [vmem:[%s2] sm:$0xff]
  %v208 = vld [vmem:[%s2 + $0x8] sm:$0xff]
  %v209 = vld [vmem:[%s2 + $0x10] sm:$0xff]
  %v210 = vld [vmem:[%s2 + $0x18] sm:$0xff]
  %v211 = vld [vmem:[%s7] sm:$0xff]
  %v212 = vld [vmem:[%s8] sm:$0xff]
  %v213 = vld [vmem:[#allocation3] sm:$0xff]
  %vm214 = vcmask 261120
  %v216 = vsel %vm214, %v211, 0
  %218 = vmatprep.subr.mxu0 0.0
  %219 = vmatpush1.msra.mxu0 %v207
  %220 = vmatprep.subr.mxu0 0.0
  %221 = vmatpush1.msra.mxu0 %v208
  %222 = vmatprep.subr.mxu0 0.0
  %223 = vmatpush1.msra.mxu0 %v209
  %224 = vmatprep.subr.mxu0 0.0
  %225 = vmatpush1.msra.mxu0 %v210
  %226 = vmatprep.subr.mxu0 0.0
  %227 = vmatpush1.msra.mxu0 0.0
  %228 = vmatprep.subr.mxu0 0.0
  %229 = vmatpush1.msra.mxu0 0.0
  %230 = vmatprep.subr.mxu0 0.0
  %231 = vmatpush1.msra.mxu0 0.0
  %232 = vmatprep.subr.mxu0 0.0
  %233 = vmatpush1.msra.mxu0 0.0
  %234 = vmatprep.subr.mxu0 0.0
  %235 = vmatpush1.msra.mxu0 0.0
  %236 = vmatprep.subr.mxu0 0.0
  %237 = vmatpush1.msra.mxu0 0.0
  %238 = vmatprep.subr.mxu0 0.0
  %239 = vmatpush1.msra.mxu0 0.0
  %240 = vmatprep.subr.mxu0 0.0
  %241 = vmatpush1.msra.mxu0 0.0
  %242 = vmatprep.subr.mxu0 0.0
  %243 = vmatpush1.msra.mxu0 0.0
  %244 = vmatprep.subr.mxu0 0.0
  %245 = vmatpush1.msra.mxu0 0.0
  %246 = vmatprep.subr.mxu0 0.0
  %247 = vmatpush1.msra.mxu0 0.0
  %248 = vmatprep.subr.mxu0 0.0
  %249 = vmatpush1.msra.mxu0 0.0
  %250 = vmatprep.subr.mxu0 0.0
  %251 = vmatpush1.msra.mxu0 0.0
  %252 = vmatprep.subr.mxu0 0.0
  %253 = vmatpush1.msra.mxu0 0.0
  %254 = vmatprep.subr.mxu0 0.0
  %255 = vmatpush1.msra.mxu0 0.0
  %256 = vmatprep.subr.mxu0 0.0
  %257 = vmatpush1.msra.mxu0 0.0
  %258 = vmatprep.subr.mxu0 0.0
  %259 = vmatpush1.msra.mxu0 0.0
  %260 = vmatprep.subr.mxu0 0.0
  %261 = vmatpush1.msra.mxu0 0.0
  %262 = vmatprep.subr.mxu0 0.0
  %263 = vmatpush1.msra.mxu0 0.0
  %264 = vmatprep.subr.mxu0 0.0
  %265 = vmatpush1.msra.mxu0 0.0
  %266 = vmatprep.subr.mxu0 0.0
  %267 = vmatpush1.msra.mxu0 0.0
  %268 = vmatprep.subr.mxu0 0.0
  %269 = vmatpush1.msra.mxu0 0.0
  %270 = vmatprep.subr.mxu0 0.0
  %271 = vmatpush1.msra.mxu0 0.0
  %272 = vmatprep.subr.mxu0 0.0
  %273 = vmatpush1.msra.mxu0 0.0
  %274 = vmatprep.subr.mxu0 0.0
  %275 = vmatpush1.msra.mxu0 0.0
  %276 = vmatprep.subr.mxu0 0.0
  %277 = vmatpush1.msra.mxu0 0.0
  %278 = vmatprep.subr.mxu0 0.0
  %279 = vmatpush1.msra.mxu0 0.0
  %280 = vmatprep.subr.mxu0 0.0
  %281 = vmatpush1.msra.mxu0 0.0
  %282 = vmatprep.mubr.f32.mxu0 0.0
  %283 = vmatmul.mubr.f32.gmra.mrb[0].mxu0 %v216
  %v284 = vpop.f32.mrb[0].mxu0
  %v285 = vadd.f32 0.0, %v284
  %v286 = vpop.f32.mrb[0].mxu0
  %287 = vdwg.mxu0
  %v288 = vadd.f32 %v213, %v285
  %v289 = vxor.u32 %v288, 2147483648
  %v290 = vmul.f32 %v289, 1.442695
  %v291 = vpow.pop %v290
  %v292 = vadd.f32 %v291, 1.0
  %v293 = vrcp.pop %v292
  %v294 = vmul.f32 1.0, %v293
  %v295 = vtanh.pop %v288
  %297 = vrot.lane.b32.xlu0 %v212, 32
  %v298 = vpop.permute.xlu0 %297
  %v300 = vmul.f32 %v294, %v298
  %302 = vrot.lane.b32.xlu0 %v295, 64
  %v303 = vpop.permute.xlu0 %302
  %v305 = vmul.f32 %v294, %v303
  %307 = vrot.lane.b32.xlu0 %v305, 32
  %v308 = vpop.permute.xlu0 %307
  %v310 = vadd.f32 %v300, %v308
  %v311 = vtanh.pop %v310
  %313 = vrot.lane.b32.xlu0 %v311, 64
  %v314 = vpop.permute.xlu0 %313
  %v316 = vmul.f32 %v294, %v314
  %318 = vrot.lane.b32.xlu0 %v316, 32
  %v319 = vpop.permute.xlu0 %318
  %321 = vst.msk [vmem:[#allocation2] sm:$0xff] %vm214, %v319
  %v322 = vld [vmem:[#allocation3 + $0x8] sm:$0xff]
  %v323 = vsel %vm214, %v319, 0
  %325 = vmatprep.subr.mxu0 0.0
  %326 = vmatpush1.msra.mxu0 %v207
  %327 = vmatprep.subr.mxu0 0.0
  %328 = vmatpush1.msra.mxu0 %v208
  %329 = vmatprep.subr.mxu0 0.0
  %330 = vmatpush1.msra.mxu0 %v209
  %331 = vmatprep.subr.mxu0 0.0
  %332 = vmatpush1.msra.mxu0 %v210
  %333 = vmatprep.subr.mxu0 0.0
  %334 = vmatpush1.msra.mxu0 0.0
  %335 = vmatprep.subr.mxu0 0.0
  %336 = vmatpush1.msra.mxu0 0.0
  %337 = vmatprep.subr.mxu0 0.0
  %338 = vmatpush1.msra.mxu0 0.0
  %339 = vmatprep.subr.mxu0 0.0
  %340 = vmatpush1.msra.mxu0 0.0
  %341 = vmatprep.subr.mxu0 0.0
  %342 = vmatpush1.msra.mxu0 0.0
  %343 = vmatprep.subr.mxu0 0.0
  %344 = vmatpush1.msra.mxu0 0.0
  %345 = vmatprep.subr.mxu0 0.0
  %346 = vmatpush1.msra.mxu0 0.0
  %347 = vmatprep.subr.mxu0 0.0
  %348 = vmatpush1.msra.mxu0 0.0
  %349 = vmatprep.subr.mxu0 0.0
  %350 = vmatpush1.msra.mxu0 0.0
  %351 = vmatprep.subr.mxu0 0.0
  %352 = vmatpush1.msra.mxu0 0.0
  %353 = vmatprep.subr.mxu0 0.0
  %354 = vmatpush1.msra.mxu0 0.0
  %355 = vmatprep.subr.mxu0 0.0
  %356 = vmatpush1.msra.mxu0 0.0
  %357 = vmatprep.subr.mxu0 0.0
  %358 = vmatpush1.msra.mxu0 0.0
  %359 = vmatprep.subr.mxu0 0.0
  %360 = vmatpush1.msra.mxu0 0.0
  %361 = vmatprep.subr.mxu0 0.0
  %362 = vmatpush1.msra.mxu0 0.0
  %363 = vmatprep.subr.mxu0 0.0
  %364 = vmatpush1.msra.mxu0 0.0
  %365 = vmatprep.subr.mxu0 0.0
  %366 = vmatpush1.msra.mxu0 0.0
  %367 = vmatprep.subr.mxu0 0.0
  %368 = vmatpush1.msra.mxu0 0.0
  %369 = vmatprep.subr.mxu0 0.0
  %370 = vmatpush1.msra.mxu0 0.0
  %371 = vmatprep.subr.mxu0 0.0
  %372 = vmatpush1.msra.mxu0 0.0
  %373 = vmatprep.subr.mxu0 0.0
  %374 = vmatpush1.msra.mxu0 0.0
  %375 = vmatprep.subr.mxu0 0.0
  %376 = vmatpush1.msra.mxu0 0.0
  %377 = vmatprep.subr.mxu0 0.0
  %378 = vmatpush1.msra.mxu0 0.0
  %379 = vmatprep.subr.mxu0 0.0
  %380 = vmatpush1.msra.mxu0 0.0
  %381 = vmatprep.subr.mxu0 0.0
  %382 = vmatpush1.msra.mxu0 0.0
  %383 = vmatprep.subr.mxu0 0.0
  %384 = vmatpush1.msra.mxu0 0.0
  %385 = vmatprep.subr.mxu0 0.0
  %386 = vmatpush1.msra.mxu0 0.0
  %387 = vmatprep.subr.mxu0 0.0
  %388 = vmatpush1.msra.mxu0 0.0
  %389 = vmatprep.mubr.f32.mxu0 0.0
  %390 = vmatmul.mubr.f32.gmra.mrb[0].mxu0 %v323
  %v391 = vpop.f32.mrb[0].mxu0
  %v392 = vadd.f32 0.0, %v391
  %v393 = vpop.f32.mrb[0].mxu0
  %394 = vdwg.mxu0
  %v395 = vadd.f32 %v322, %v392
  %v396 = vxor.u32 %v395, 2147483648
  %v397 = vmul.f32 %v396, 1.442695
  %v398 = vpow.pop %v397
  %v399 = vadd.f32 %v398, 1.0
  %v400 = vrcp.pop %v399
  %v401 = vmul.f32 1.0, %v400
  %v402 = vtanh.pop %v395
  %v403 = vmul.f32 %v401, %v310
  %405 = vrot.lane.b32.xlu0 %v402, 64
  %v406 = vpop.permute.xlu0 %405
  %v408 = vmul.f32 %v401, %v406
  %410 = vrot.lane.b32.xlu0 %v408, 32
  %v411 = vpop.permute.xlu0 %410
  %v413 = vadd.f32 %v403, %v411
  %v414 = vtanh.pop %v413
  %416 = vrot.lane.b32.xlu0 %v414, 64
  %v417 = vpop.permute.xlu0 %416
  %v419 = vmul.f32 %v401, %v417
  %421 = vrot.lane.b32.xlu0 %v419, 32
  %v422 = vpop.permute.xlu0 %421
  %424 = vst.msk [vmem:[#allocation2 + $0x8] sm:$0xff] %vm214, %v422
  %v425 = vld [vmem:[#allocation3 + $0x10] sm:$0xff]
  %v426 = vsel %vm214, %v422, 0
  %428 = vmatprep.subr.mxu0 0.0
  %429 = vmatpush1.msra.mxu0 %v207
  %430 = vmatprep.subr.mxu0 0.0
  %431 = vmatpush1.msra.mxu0 %v208
  %432 = vmatprep.subr.mxu0 0.0
  %433 = vmatpush1.msra.mxu0 %v209
  %434 = vmatprep.subr.mxu0 0.0
  %435 = vmatpush1.msra.mxu0 %v210
  %436 = vmatprep.subr.mxu0 0.0
  %437 = vmatpush1.msra.mxu0 0.0
  %438 = vmatprep.subr.mxu0 0.0
  %439 = vmatpush1.msra.mxu0 0.0
  %440 = vmatprep.subr.mxu0 0.0
  %441 = vmatpush1.msra.mxu0 0.0
  %442 = vmatprep.subr.mxu0 0.0
  %443 = vmatpush1.msra.mxu0 0.0
  %444 = vmatprep.subr.mxu0 0.0
  %445 = vmatpush1.msra.mxu0 0.0
  %446 = vmatprep.subr.mxu0 0.0
  %447 = vmatpush1.msra.mxu0 0.0
  %448 = vmatprep.subr.mxu0 0.0
  %449 = vmatpush1.msra.mxu0 0.0
  %450 = vmatprep.subr.mxu0 0.0
  %451 = vmatpush1.msra.mxu0 0.0
  %452 = vmatprep.subr.mxu0 0.0
  %453 = vmatpush1.msra.mxu0 0.0
  %454 = vmatprep.subr.mxu0 0.0
  %455 = vmatpush1.msra.mxu0 0.0
  %456 = vmatprep.subr.mxu0 0.0
  %457 = vmatpush1.msra.mxu0 0.0
  %458 = vmatprep.subr.mxu0 0.0
  %459 = vmatpush1.msra.mxu0 0.0
  %460 = vmatprep.subr.mxu0 0.0
  %461 = vmatpush1.msra.mxu0 0.0
  %462 = vmatprep.subr.mxu0 0.0
  %463 = vmatpush1.msra.mxu0 0.0
  %464 = vmatprep.subr.mxu0 0.0
  %465 = vmatpush1.msra.mxu0 0.0
  %466 = vmatprep.subr.mxu0 0.0
  %467 = vmatpush1.msra.mxu0 0.0
  %468 = vmatprep.subr.mxu0 0.0
  %469 = vmatpush1.msra.mxu0 0.0
  %470 = vmatprep.subr.mxu0 0.0
  %471 = vmatpush1.msra.mxu0 0.0
  %472 = vmatprep.subr.mxu0 0.0
  %473 = vmatpush1.msra.mxu0 0.0
  %474 = vmatprep.subr.mxu0 0.0
  %475 = vmatpush1.msra.mxu0 0.0
  %476 = vmatprep.subr.mxu0 0.0
  %477 = vmatpush1.msra.mxu0 0.0
  %478 = vmatprep.subr.mxu0 0.0
  %479 = vmatpush1.msra.mxu0 0.0
  %480 = vmatprep.subr.mxu0 0.0
  %481 = vmatpush1.msra.mxu0 0.0
  %482 = vmatprep.subr.mxu0 0.0
  %483 = vmatpush1.msra.mxu0 0.0
  %484 = vmatprep.subr.mxu0 0.0
  %485 = vmatpush1.msra.mxu0 0.0
  %486 = vmatprep.subr.mxu0 0.0
  %487 = vmatpush1.msra.mxu0 0.0
  %488 = vmatprep.subr.mxu0 0.0
  %489 = vmatpush1.msra.mxu0 0.0
  %490 = vmatprep.subr.mxu0 0.0
  %491 = vmatpush1.msra.mxu0 0.0
  %492 = vmatprep.mubr.f32.mxu0 0.0
  %493 = vmatmul.mubr.f32.gmra.mrb[0].mxu0 %v426
  %v494 = vpop.f32.mrb[0].mxu0
  %v495 = vadd.f32 0.0, %v494
  %v496 = vpop.f32.mrb[0].mxu0
  %497 = vdwg.mxu0
  %v498 = vadd.f32 %v425, %v495
  %v499 = vxor.u32 %v498, 2147483648
  %v500 = vmul.f32 %v499, 1.442695
  %v501 = vpow.pop %v500
  %v502 = vadd.f32 %v501, 1.0
  %v503 = vrcp.pop %v502
  %v504 = vmul.f32 1.0, %v503
  %v505 = vtanh.pop %v498
  %v506 = vmul.f32 %v504, %v413
  %508 = vrot.lane.b32.xlu0 %v505, 64
  %v509 = vpop.permute.xlu0 %508
  %v511 = vmul.f32 %v504, %v509
  %513 = vrot.lane.b32.xlu0 %v511, 32
  %v514 = vpop.permute.xlu0 %513
  %v516 = vadd.f32 %v506, %v514
  %v517 = vtanh.pop %v516
  %519 = vrot.lane.b32.xlu0 %v517, 64
  %v520 = vpop.permute.xlu0 %519
  %v522 = vmul.f32 %v504, %v520
  %524 = vrot.lane.b32.xlu0 %v522, 32
  %v525 = vpop.permute.xlu0 %524
  %527 = vst.msk [vmem:[#allocation2 + $0x10] sm:$0xff] %vm214, %v525
  %v528 = vld [vmem:[#allocation3 + $0x18] sm:$0xff]
  %v529 = vsel %vm214, %v525, 0
  %531 = vmatprep.subr.mxu0 0.0
  %532 = vmatpush1.msra.mxu0 %v207
  %533 = vmatprep.subr.mxu0 0.0
  %534 = vmatpush1.msra.mxu0 %v208
  %535 = vmatprep.subr.mxu0 0.0
  %536 = vmatpush1.msra.mxu0 %v209
  %537 = vmatprep.subr.mxu0 0.0
  %538 = vmatpush1.msra.mxu0 %v210
  %539 = vmatprep.subr.mxu0 0.0
  %540 = vmatpush1.msra.mxu0 0.0
  %541 = vmatprep.subr.mxu0 0.0
  %542 = vmatpush1.msra.mxu0 0.0
  %543 = vmatprep.subr.mxu0 0.0
  %544 = vmatpush1.msra.mxu0 0.0
  %545 = vmatprep.subr.mxu0 0.0
  %546 = vmatpush1.msra.mxu0 0.0
  %547 = vmatprep.subr.mxu0 0.0
  %548 = vmatpush1.msra.mxu0 0.0
  %549 = vmatprep.subr.mxu0 0.0
  %550 = vmatpush1.msra.mxu0 0.0
  %551 = vmatprep.subr.mxu0 0.0
  %552 = vmatpush1.msra.mxu0 0.0
  %553 = vmatprep.subr.mxu0 0.0
  %554 = vmatpush1.msra.mxu0 0.0
  %555 = vmatprep.subr.mxu0 0.0
  %556 = vmatpush1.msra.mxu0 0.0
  %557 = vmatprep.subr.mxu0 0.0
  %558 = vmatpush1.msra.mxu0 0.0
  %559 = vmatprep.subr.mxu0 0.0
  %560 = vmatpush1.msra.mxu0 0.0
  %561 = vmatprep.subr.mxu0 0.0
  %562 = vmatpush1.msra.mxu0 0.0
  %563 = vmatprep.subr.mxu0 0.0
  %564 = vmatpush1.msra.mxu0 0.0
  %565 = vmatprep.subr.mxu0 0.0
  %566 = vmatpush1.msra.mxu0 0.0
  %567 = vmatprep.subr.mxu0 0.0
  %568 = vmatpush1.msra.mxu0 0.0
  %569 = vmatprep.subr.mxu0 0.0
  %570 = vmatpush1.msra.mxu0 0.0
  %571 = vmatprep.subr.mxu0 0.0
  %572 = vmatpush1.msra.mxu0 0.0
  %573 = vmatprep.subr.mxu0 0.0
  %574 = vmatpush1.msra.mxu0 0.0
  %575 = vmatprep.subr.mxu0 0.0
  %576 = vmatpush1.msra.mxu0 0.0
  %577 = vmatprep.subr.mxu0 0.0
  %578 = vmatpush1.msra.mxu0 0.0
  %579 = vmatprep.subr.mxu0 0.0
  %580 = vmatpush1.msra.mxu0 0.0
  %581 = vmatprep.subr.mxu0 0.0
  %582 = vmatpush1.msra.mxu0 0.0
  %583 = vmatprep.subr.mxu0 0.0
  %584 = vmatpush1.msra.mxu0 0.0
  %585 = vmatprep.subr.mxu0 0.0
  %586 = vmatpush1.msra.mxu0 0.0
  %587 = vmatprep.subr.mxu0 0.0
  %588 = vmatpush1.msra.mxu0 0.0
  %589 = vmatprep.subr.mxu0 0.0
  %590 = vmatpush1.msra.mxu0 0.0
  %591 = vmatprep.subr.mxu0 0.0
  %592 = vmatpush1.msra.mxu0 0.0
  %593 = vmatprep.subr.mxu0 0.0
  %594 = vmatpush1.msra.mxu0 0.0
  %595 = vmatprep.mubr.f32.mxu0 0.0
  %596 = vmatmul.mubr.f32.gmra.mrb[0].mxu0 %v529
  %v597 = vpop.f32.mrb[0].mxu0
  %v598 = vadd.f32 0.0, %v597
  %v599 = vpop.f32.mrb[0].mxu0
  %600 = vdwg.mxu0
  %v601 = vadd.f32 %v528, %v598
  %v602 = vxor.u32 %v601, 2147483648
  %v603 = vmul.f32 %v602, 1.442695
  %v604 = vpow.pop %v603
  %v605 = vadd.f32 %v604, 1.0
  %v606 = vrcp.pop %v605
  %v607 = vmul.f32 1.0, %v606
  %v608 = vtanh.pop %v601
  %v609 = vmul.f32 %v607, %v516
  %611 = vrot.lane.b32.xlu0 %v608, 64
  %v612 = vpop.permute.xlu0 %611
  %v614 = vmul.f32 %v607, %v612
  %616 = vrot.lane.b32.xlu0 %v614, 32
  %v617 = vpop.permute.xlu0 %616
  %v619 = vadd.f32 %v609, %v617
  %v620 = vtanh.pop %v619
  %622 = vrot.lane.b32.xlu0 %v620, 64
  %v623 = vpop.permute.xlu0 %622
  %v625 = vmul.f32 %v607, %v623
  %627 = vrot.lane.b32.xlu0 %v625, 32
  %v628 = vpop.permute.xlu0 %627
  %630 = vst.msk [vmem:[#allocation2 + $0x18] sm:$0xff] %vm214, %v628
  %v631 = vld [vmem:[#allocation3 + $0x20] sm:$0xff]
  %v632 = vsel %vm214, %v628, 0
  %634 = vmatprep.subr.mxu0 0.0
  %635 = vmatpush1.msra.mxu0 %v207
  %636 = vmatprep.subr.mxu0 0.0
  %637 = vmatpush1.msra.mxu0 %v208
  %638 = vmatprep.subr.mxu0 0.0
  %639 = vmatpush1.msra.mxu0 %v209
  %640 = vmatprep.subr.mxu0 0.0
  %641 = vmatpush1.msra.mxu0 %v210
  %642 = vmatprep.subr.mxu0 0.0
  %643 = vmatpush1.msra.mxu0 0.0
  %644 = vmatprep.subr.mxu0 0.0
  %645 = vmatpush1.msra.mxu0 0.0
  %646 = vmatprep.subr.mxu0 0.0
  %647 = vmatpush1.msra.mxu0 0.0
  %648 = vmatprep.subr.mxu0 0.0
  %649 = vmatpush1.msra.mxu0 0.0
  %650 = vmatprep.subr.mxu0 0.0
  %651 = vmatpush1.msra.mxu0 0.0
  %652 = vmatprep.subr.mxu0 0.0
  %653 = vmatpush1.msra.mxu0 0.0
  %654 = vmatprep.subr.mxu0 0.0
  %655 = vmatpush1.msra.mxu0 0.0
  %656 = vmatprep.subr.mxu0 0.0
  %657 = vmatpush1.msra.mxu0 0.0
  %658 = vmatprep.subr.mxu0 0.0
  %659 = vmatpush1.msra.mxu0 0.0
  %660 = vmatprep.subr.mxu0 0.0
  %661 = vmatpush1.msra.mxu0 0.0
  %662 = vmatprep.subr.mxu0 0.0
  %663 = vmatpush1.msra.mxu0 0.0
  %664 = vmatprep.subr.mxu0 0.0
  %665 = vmatpush1.msra.mxu0 0.0
  %666 = vmatprep.subr.mxu0 0.0
  %667 = vmatpush1.msra.mxu0 0.0
  %668 = vmatprep.subr.mxu0 0.0
  %669 = vmatpush1.msra.mxu0 0.0
  %670 = vmatprep.subr.mxu0 0.0
  %671 = vmatpush1.msra.mxu0 0.0
  %672 = vmatprep.subr.mxu0 0.0
  %673 = vmatpush1.msra.mxu0 0.0
  %674 = vmatprep.subr.mxu0 0.0
  %675 = vmatpush1.msra.mxu0 0.0
  %676 = vmatprep.subr.mxu0 0.0
  %677 = vmatpush1.msra.mxu0 0.0
  %678 = vmatprep.subr.mxu0 0.0
  %679 = vmatpush1.msra.mxu0 0.0
  %680 = vmatprep.subr.mxu0 0.0
  %681 = vmatpush1.msra.mxu0 0.0
  %682 = vmatprep.subr.mxu0 0.0
  %683 = vmatpush1.msra.mxu0 0.0
  %684 = vmatprep.subr.mxu0 0.0
  %685 = vmatpush1.msra.mxu0 0.0
  %686 = vmatprep.subr.mxu0 0.0
  %687 = vmatpush1.msra.mxu0 0.0
  %688 = vmatprep.subr.mxu0 0.0
  %689 = vmatpush1.msra.mxu0 0.0
  %690 = vmatprep.subr.mxu0 0.0
  %691 = vmatpush1.msra.mxu0 0.0
  %692 = vmatprep.subr.mxu0 0.0
  %693 = vmatpush1.msra.mxu0 0.0
  %694 = vmatprep.subr.mxu0 0.0
  %695 = vmatpush1.msra.mxu0 0.0
  %696 = vmatprep.subr.mxu0 0.0
  %697 = vmatpush1.msra.mxu0 0.0
  %698 = vmatprep.mubr.f32.mxu0 0.0
  %699 = vmatmul.mubr.f32.gmra.mrb[0].mxu0 %v632
  %v700 = vpop.f32.mrb[0].mxu0
  %v701 = vadd.f32 0.0, %v700
  %v702 = vpop.f32.mrb[0].mxu0
  %703 = vdwg.mxu0
  %v704 = vadd.f32 %v631, %v701
  %v705 = vxor.u32 %v704, 2147483648
  %v706 = vmul.f32 %v705, 1.442695
  %v707 = vpow.pop %v706
  %v708 = vadd.f32 %v707, 1.0
  %v709 = vrcp.pop %v708
  %v710 = vmul.f32 1.0, %v709
  %v711 = vtanh.pop %v704
  %v712 = vmul.f32 %v710, %v619
  %714 = vrot.lane.b32.xlu0 %v711, 64
  %v715 = vpop.permute.xlu0 %714
  %v717 = vmul.f32 %v710, %v715
  %719 = vrot.lane.b32.xlu0 %v717, 32
  %v720 = vpop.permute.xlu0 %719
  %v722 = vadd.f32 %v712, %v720
  %v723 = vtanh.pop %v722
  %725 = vrot.lane.b32.xlu0 %v723, 64
  %v726 = vpop.permute.xlu0 %725
  %v728 = vmul.f32 %v710, %v726
  %730 = vrot.lane.b32.xlu0 %v728, 32
  %v731 = vpop.permute.xlu0 %730
  %733 = vst.msk [vmem:[#allocation2 + $0x20] sm:$0xff] %vm214, %v731
  %v734 = vld [vmem:[#allocation3 + $0x28] sm:$0xff]
  %v735 = vsel %vm214, %v731, 0
  %737 = vmatprep.subr.mxu0 0.0
  %738 = vmatpush1.msra.mxu0 %v207
  %739 = vmatprep.subr.mxu0 0.0
  %740 = vmatpush1.msra.mxu0 %v208
  %741 = vmatprep.subr.mxu0 0.0
  %742 = vmatpush1.msra.mxu0 %v209
  %743 = vmatprep.subr.mxu0 0.0
  %744 = vmatpush1.msra.mxu0 %v210
  %745 = vmatprep.subr.mxu0 0.0
  %746 = vmatpush1.msra.mxu0 0.0
  %747 = vmatprep.subr.mxu0 0.0
  %748 = vmatpush1.msra.mxu0 0.0
  %749 = vmatprep.subr.mxu0 0.0
  %750 = vmatpush1.msra.mxu0 0.0
  %751 = vmatprep.subr.mxu0 0.0
  %752 = vmatpush1.msra.mxu0 0.0
  %753 = vmatprep.subr.mxu0 0.0
  %754 = vmatpush1.msra.mxu0 0.0
  %755 = vmatprep.subr.mxu0 0.0
  %756 = vmatpush1.msra.mxu0 0.0
  %757 = vmatprep.subr.mxu0 0.0
  %758 = vmatpush1.msra.mxu0 0.0
  %759 = vmatprep.subr.mxu0 0.0
  %760 = vmatpush1.msra.mxu0 0.0
  %761 = vmatprep.subr.mxu0 0.0
  %762 = vmatpush1.msra.mxu0 0.0
  %763 = vmatprep.subr.mxu0 0.0
  %764 = vmatpush1.msra.mxu0 0.0
  %765 = vmatprep.subr.mxu0 0.0
  %766 = vmatpush1.msra.mxu0 0.0
  %767 = vmatprep.subr.mxu0 0.0
  %768 = vmatpush1.msra.mxu0 0.0
  %769 = vmatprep.subr.mxu0 0.0
  %770 = vmatpush1.msra.mxu0 0.0
  %771 = vmatprep.subr.mxu0 0.0
  %772 = vmatpush1.msra.mxu0 0.0
  %773 = vmatprep.subr.mxu0 0.0
  %774 = vmatpush1.msra.mxu0 0.0
  %775 = vmatprep.subr.mxu0 0.0
  %776 = vmatpush1.msra.mxu0 0.0
  %777 = vmatprep.subr.mxu0 0.0
  %778 = vmatpush1.msra.mxu0 0.0
  %779 = vmatprep.subr.mxu0 0.0
  %780 = vmatpush1.msra.mxu0 0.0
  %781 = vmatprep.subr.mxu0 0.0
  %782 = vmatpush1.msra.mxu0 0.0
  %783 = vmatprep.subr.mxu0 0.0
  %784 = vmatpush1.msra.mxu0 0.0
  %785 = vmatprep.subr.mxu0 0.0
  %786 = vmatpush1.msra.mxu0 0.0
  %787 = vmatprep.subr.mxu0 0.0
  %788 = vmatpush1.msra.mxu0 0.0
  %789 = vmatprep.subr.mxu0 0.0
  %790 = vmatpush1.msra.mxu0 0.0
  %791 = vmatprep.subr.mxu0 0.0
  %792 = vmatpush1.msra.mxu0 0.0
  %793 = vmatprep.subr.mxu0 0.0
  %794 = vmatpush1.msra.mxu0 0.0
  %795 = vmatprep.subr.mxu0 0.0
  %796 = vmatpush1.msra.mxu0 0.0
  %797 = vmatprep.subr.mxu0 0.0
  %798 = vmatpush1.msra.mxu0 0.0
  %799 = vmatprep.subr.mxu0 0.0
  %800 = vmatpush1.msra.mxu0 0.0
  %801 = vmatprep.mubr.f32.mxu0 0.0
  %802 = vmatmul.mubr.f32.gmra.mrb[0].mxu0 %v735
  %v803 = vpop.f32.mrb[0].mxu0
  %v804 = vadd.f32 0.0, %v803
  %v805 = vpop.f32.mrb[0].mxu0
  %806 = vdwg.mxu0
  %v807 = vadd.f32 %v734, %v804
  %v808 = vxor.u32 %v807, 2147483648
  %v809 = vmul.f32 %v808, 1.442695
  %v810 = vpow.pop %v809
  %v811 = vadd.f32 %v810, 1.0
  %v812 = vrcp.pop %v811
  %v813 = vmul.f32 1.0, %v812
  %v814 = vtanh.pop %v807
  %v815 = vmul.f32 %v813, %v722
  %817 = vrot.lane.b32.xlu0 %v814, 64
  %v818 = vpop.permute.xlu0 %817
  %v820 = vmul.f32 %v813, %v818
  %822 = vrot.lane.b32.xlu0 %v820, 32
  %v823 = vpop.permute.xlu0 %822
  %v825 = vadd.f32 %v815, %v823
  %v826 = vtanh.pop %v825
  %828 = vrot.lane.b32.xlu0 %v826, 64
  %v829 = vpop.permute.xlu0 %828
  %v831 = vmul.f32 %v813, %v829
  %833 = vrot.lane.b32.xlu0 %v831, 32
  %v834 = vpop.permute.xlu0 %833
  %836 = vst.msk [vmem:[#allocation2 + $0x28] sm:$0xff] %vm214, %v834
  %v837 = vld [vmem:[#allocation3 + $0x30] sm:$0xff]
  %v838 = vsel %vm214, %v834, 0
  %840 = vmatprep.subr.mxu0 0.0
  %841 = vmatpush1.msra.mxu0 %v207
  %842 = vmatprep.subr.mxu0 0.0
  %843 = vmatpush1.msra.mxu0 %v208
  %844 = vmatprep.subr.mxu0 0.0
  %845 = vmatpush1.msra.mxu0 %v209
  %846 = vmatprep.subr.mxu0 0.0
  %847 = vmatpush1.msra.mxu0 %v210
  %848 = vmatprep.subr.mxu0 0.0
  %849 = vmatpush1.msra.mxu0 0.0
  %850 = vmatprep.subr.mxu0 0.0
  %851 = vmatpush1.msra.mxu0 0.0
  %852 = vmatprep.subr.mxu0 0.0
  %853 = vmatpush1.msra.mxu0 0.0
  %854 = vmatprep.subr.mxu0 0.0
  %855 = vmatpush1.msra.mxu0 0.0
  %856 = vmatprep.subr.mxu0 0.0
  %857 = vmatpush1.msra.mxu0 0.0
  %858 = vmatprep.subr.mxu0 0.0
  %859 = vmatpush1.msra.mxu0 0.0
  %860 = vmatprep.subr.mxu0 0.0
  %861 = vmatpush1.msra.mxu0 0.0
  %862 = vmatprep.subr.mxu0 0.0
  %863 = vmatpush1.msra.mxu0 0.0
  %864 = vmatprep.subr.mxu0 0.0
  %865 = vmatpush1.msra.mxu0 0.0
  %866 = vmatprep.subr.mxu0 0.0
  %867 = vmatpush1.msra.mxu0 0.0
  %868 = vmatprep.subr.mxu0 0.0
  %869 = vmatpush1.msra.mxu0 0.0
  %870 = vmatprep.subr.mxu0 0.0
  %871 = vmatpush1.msra.mxu0 0.0
  %872 = vmatprep.subr.mxu0 0.0
  %873 = vmatpush1.msra.mxu0 0.0
  %874 = vmatprep.subr.mxu0 0.0
  %875 = vmatpush1.msra.mxu0 0.0
  %876 = vmatprep.subr.mxu0 0.0
  %877 = vmatpush1.msra.mxu0 0.0
  %878 = vmatprep.subr.mxu0 0.0
  %879 = vmatpush1.msra.mxu0 0.0
  %880 = vmatprep.subr.mxu0 0.0
  %881 = vmatpush1.msra.mxu0 0.0
  %882 = vmatprep.subr.mxu0 0.0
  %883 = vmatpush1.msra.mxu0 0.0
  %884 = vmatprep.subr.mxu0 0.0
  %885 = vmatpush1.msra.mxu0 0.0
  %886 = vmatprep.subr.mxu0 0.0
  %887 = vmatpush1.msra.mxu0 0.0
  %888 = vmatprep.subr.mxu0 0.0
  %889 = vmatpush1.msra.mxu0 0.0
  %890 = vmatprep.subr.mxu0 0.0
  %891 = vmatpush1.msra.mxu0 0.0
  %892 = vmatprep.subr.mxu0 0.0
  %893 = vmatpush1.msra.mxu0 0.0
  %894 = vmatprep.subr.mxu0 0.0
  %895 = vmatpush1.msra.mxu0 0.0
  %896 = vmatprep.subr.mxu0 0.0
  %897 = vmatpush1.msra.mxu0 0.0
  %898 = vmatprep.subr.mxu0 0.0
  %899 = vmatpush1.msra.mxu0 0.0
  %900 = vmatprep.subr.mxu0 0.0
  %901 = vmatpush1.msra.mxu0 0.0
  %902 = vmatprep.subr.mxu0 0.0
  %903 = vmatpush1.msra.mxu0 0.0
  %904 = vmatprep.mubr.f32.mxu0 0.0
  %905 = vmatmul.mubr.f32.gmra.mrb[0].mxu0 %v838
  %v906 = vpop.f32.mrb[0].mxu0
  %v907 = vadd.f32 0.0, %v906
  %v908 = vpop.f32.mrb[0].mxu0
  %909 = vdwg.mxu0
  %v910 = vadd.f32 %v837, %v907
  %v911 = vxor.u32 %v910, 2147483648
  %v912 = vmul.f32 %v911, 1.442695
  %v913 = vpow.pop %v912
  %v914 = vadd.f32 %v913, 1.0
  %v915 = vrcp.pop %v914
  %v916 = vmul.f32 1.0, %v915
  %v917 = vtanh.pop %v910
  %v918 = vmul.f32 %v916, %v825
  %920 = vrot.lane.b32.xlu0 %v917, 64
  %v921 = vpop.permute.xlu0 %920
  %v923 = vmul.f32 %v916, %v921
  %925 = vrot.lane.b32.xlu0 %v923, 32
  %v926 = vpop.permute.xlu0 %925
  %v928 = vadd.f32 %v918, %v926
  %v929 = vtanh.pop %v928
  %931 = vrot.lane.b32.xlu0 %v929, 64
  %v932 = vpop.permute.xlu0 %931
  %v934 = vmul.f32 %v916, %v932
  %936 = vrot.lane.b32.xlu0 %v934, 32
  %v937 = vpop.permute.xlu0 %936
  %939 = vst.msk [vmem:[#allocation2 + $0x30] sm:$0xff] %vm214, %v937
  %v940 = vld [vmem:[#allocation3 + $0x38] sm:$0xff]
  %v941 = vsel %vm214, %v937, 0
  %943 = vmatprep.subr.mxu0 0.0
  %944 = vmatpush1.msra.mxu0 %v207
  %945 = vmatprep.subr.mxu0 0.0
  %946 = vmatpush1.msra.mxu0 %v208
  %947 = vmatprep.subr.mxu0 0.0
  %948 = vmatpush1.msra.mxu0 %v209
  %949 = vmatprep.subr.mxu0 0.0
  %950 = vmatpush1.msra.mxu0 %v210
  %951 = vmatprep.subr.mxu0 0.0
  %952 = vmatpush1.msra.mxu0 0.0
  %953 = vmatprep.subr.mxu0 0.0
  %954 = vmatpush1.msra.mxu0 0.0
  %955 = vmatprep.subr.mxu0 0.0
  %956 = vmatpush1.msra.mxu0 0.0
  %957 = vmatprep.subr.mxu0 0.0
  %958 = vmatpush1.msra.mxu0 0.0
  %959 = vmatprep.subr.mxu0 0.0
  %960 = vmatpush1.msra.mxu0 0.0
  %961 = vmatprep.subr.mxu0 0.0
  %962 = vmatpush1.msra.mxu0 0.0
  %963 = vmatprep.subr.mxu0 0.0
  %964 = vmatpush1.msra.mxu0 0.0
  %965 = vmatprep.subr.mxu0 0.0
  %966 = vmatpush1.msra.mxu0 0.0
  %967 = vmatprep.subr.mxu0 0.0
  %968 = vmatpush1.msra.mxu0 0.0
  %969 = vmatprep.subr.mxu0 0.0
  %970 = vmatpush1.msra.mxu0 0.0
  %971 = vmatprep.subr.mxu0 0.0
  %972 = vmatpush1.msra.mxu0 0.0
  %973 = vmatprep.subr.mxu0 0.0
  %974 = vmatpush1.msra.mxu0 0.0
  %975 = vmatprep.subr.mxu0 0.0
  %976 = vmatpush1.msra.mxu0 0.0
  %977 = vmatprep.subr.mxu0 0.0
  %978 = vmatpush1.msra.mxu0 0.0
  %979 = vmatprep.subr.mxu0 0.0
  %980 = vmatpush1.msra.mxu0 0.0
  %981 = vmatprep.subr.mxu0 0.0
  %982 = vmatpush1.msra.mxu0 0.0
  %983 = vmatprep.subr.mxu0 0.0
  %984 = vmatpush1.msra.mxu0 0.0
  %985 = vmatprep.subr.mxu0 0.0
  %986 = vmatpush1.msra.mxu0 0.0
  %987 = vmatprep.subr.mxu0 0.0
  %988 = vmatpush1.msra.mxu0 0.0
  %989 = vmatprep.subr.mxu0 0.0
  %990 = vmatpush1.msra.mxu0 0.0
  %991 = vmatprep.subr.mxu0 0.0
  %992 = vmatpush1.msra.mxu0 0.0
  %993 = vmatprep.subr.mxu0 0.0
  %994 = vmatpush1.msra.mxu0 0.0
  %995 = vmatprep.subr.mxu0 0.0
  %996 = vmatpush1.msra.mxu0 0.0
  %997 = vmatprep.subr.mxu0 0.0
  %998 = vmatpush1.msra.mxu0 0.0
  %999 = vmatprep.subr.mxu0 0.0
  %1000 = vmatpush1.msra.mxu0 0.0
  %1001 = vmatprep.subr.mxu0 0.0
  %1002 = vmatpush1.msra.mxu0 0.0
  %1003 = vmatprep.subr.mxu0 0.0
  %1004 = vmatpush1.msra.mxu0 0.0
  %1005 = vmatprep.subr.mxu0 0.0
  %1006 = vmatpush1.msra.mxu0 0.0
  %1007 = vmatprep.mubr.f32.mxu0 0.0
  %1008 = vmatmul.mubr.f32.gmra.mrb[0].mxu0 %v941
  %v1009 = vpop.f32.mrb[0].mxu0
  %v1010 = vadd.f32 0.0, %v1009
  %v1011 = vpop.f32.mrb[0].mxu0
  %1012 = vdwg.mxu0
  %v1013 = vadd.f32 %v940, %v1010
  %v1014 = vxor.u32 %v1013, 2147483648
  %v1015 = vmul.f32 %v1014, 1.442695
  %v1016 = vpow.pop %v1015
  %v1017 = vadd.f32 %v1016, 1.0
  %v1018 = vrcp.pop %v1017
  %v1019 = vmul.f32 1.0, %v1018
  %v1020 = vtanh.pop %v1013
  %v1021 = vmul.f32 %v1019, %v928
  %1023 = vrot.lane.b32.xlu0 %v1020, 64
  %v1024 = vpop.permute.xlu0 %1023
  %v1026 = vmul.f32 %v1019, %v1024
  %1028 = vrot.lane.b32.xlu0 %v1026, 32
  %v1029 = vpop.permute.xlu0 %1028
  %v1031 = vadd.f32 %v1021, %v1029
  %v1032 = vtanh.pop %v1031
  %1034 = vrot.lane.b32.xlu0 %v1032, 64
  %v1035 = vpop.permute.xlu0 %1034
  %v1037 = vmul.f32 %v1019, %v1035
  %1039 = vrot.lane.b32.xlu0 %v1037, 32
  %v1040 = vpop.permute.xlu0 %1039
  %1042 = vst.msk [vmem:[#allocation2 + $0x38] sm:$0xff] %vm214, %v1040
  %1043 = vst.msk [vmem:[%s15] sm:$0xff] %vm214, %v1040
  %1045 = vrot.lane.b32.xlu0 %v1031, 96
  %v1046 = vpop.permute.xlu0 %1045
  %1048 = vst.msk [vmem:[%s16] sm:$0xff] %vm214, %v1046
  %v1049 = vld [vmem:[#allocation2] sm:$0xff]
  %v1050 = vld [vmem:[#allocation2 + $0x8] sm:$0xff]
  %v1051 = vld [vmem:[#allocation2 + $0x10] sm:$0xff]
  %v1052 = vld [vmem:[#allocation2 + $0x18] sm:$0xff]
  %v1053 = vld [vmem:[#allocation2 + $0x20] sm:$0xff]
  %v1054 = vld [vmem:[#allocation2 + $0x28] sm:$0xff]
  %v1055 = vld [vmem:[#allocation2 + $0x30] sm:$0xff]
  %v1056 = vld [vmem:[#allocation2 + $0x38] sm:$0xff]
  %v1057 = vld [vmem:[%s4] sm:$0xff]
  %v1058 = vld [vmem:[%s4 + $0x8] sm:$0xff]
  %v1059 = vld [vmem:[%s4 + $0x10] sm:$0xff]
  %v1060 = vld [vmem:[%s4 + $0x18] sm:$0xff]
  %v1061 = vld [vmem:[%s6] sm:$0x1]
  %v1063 = vlaneseq
  %v1064 = vshrl.u32 %v1063, 7
  %v1065 = vsub.s32 0, %v1064
  %v1066 = vrot.slane %v1061, %v1065
  %v1069 = vsel %vm214, %v1049, 0
  %v1072 = vsel %vm214, %v1050, 0
  %v1075 = vsel %vm214, %v1051, 0
  %v1078 = vsel %vm214, %v1052, 0
  %v1081 = vsel %vm214, %v1053, 0
  %v1084 = vsel %vm214, %v1054, 0
  %v1087 = vsel %vm214, %v1055, 0
  %v1090 = vsel %vm214, %v1056, 0
  %1092 = vmatprep.subr.mxu0 0.0
  %1093 = vmatpush1.msra.mxu0 %v1057
  %1094 = vmatprep.subr.mxu0 0.0
  %1095 = vmatpush1.msra.mxu0 %v1058
  %1096 = vmatprep.subr.mxu0 0.0
  %1097 = vmatpush1.msra.mxu0 %v1059
  %1098 = vmatprep.subr.mxu0 0.0
  %1099 = vmatpush1.msra.mxu0 %v1060
  %1100 = vmatprep.subr.mxu0 0.0
  %1101 = vmatpush1.msra.mxu0 0.0
  %1102 = vmatprep.subr.mxu0 0.0
  %1103 = vmatpush1.msra.mxu0 0.0
  %1104 = vmatprep.subr.mxu0 0.0
  %1105 = vmatpush1.msra.mxu0 0.0
  %1106 = vmatprep.subr.mxu0 0.0
  %1107 = vmatpush1.msra.mxu0 0.0
  %1108 = vmatprep.subr.mxu0 0.0
  %1109 = vmatpush1.msra.mxu0 0.0
  %1110 = vmatprep.subr.mxu0 0.0
  %1111 = vmatpush1.msra.mxu0 0.0
  %1112 = vmatprep.subr.mxu0 0.0
  %1113 = vmatpush1.msra.mxu0 0.0
  %1114 = vmatprep.subr.mxu0 0.0
  %1115 = vmatpush1.msra.mxu0 0.0
  %1116 = vmatprep.subr.mxu0 0.0
  %1117 = vmatpush1.msra.mxu0 0.0
  %1118 = vmatprep.subr.mxu0 0.0
  %1119 = vmatpush1.msra.mxu0 0.0
  %1120 = vmatprep.subr.mxu0 0.0
  %1121 = vmatpush1.msra.mxu0 0.0
  %1122 = vmatprep.subr.mxu0 0.0
  %1123 = vmatpush1.msra.mxu0 0.0
  %1124 = vmatprep.subr.mxu0 0.0
  %1125 = vmatpush1.msra.mxu0 0.0
  %1126 = vmatprep.subr.mxu0 0.0
  %1127 = vmatpush1.msra.mxu0 0.0
  %1128 = vmatprep.subr.mxu0 0.0
  %1129 = vmatpush1.msra.mxu0 0.0
  %1130 = vmatprep.subr.mxu0 0.0
  %1131 = vmatpush1.msra.mxu0 0.0
  %1132 = vmatprep.subr.mxu0 0.0
  %1133 = vmatpush1.msra.mxu0 0.0
  %1134 = vmatprep.subr.mxu0 0.0
  %1135 = vmatpush1.msra.mxu0 0.0
  %1136 = vmatprep.subr.mxu0 0.0
  %1137 = vmatpush1.msra.mxu0 0.0
  %1138 = vmatprep.subr.mxu0 0.0
  %1139 = vmatpush1.msra.mxu0 0.0
  %1140 = vmatprep.subr.mxu0 0.0
  %1141 = vmatpush1.msra.mxu0 0.0
  %1142 = vmatprep.subr.mxu0 0.0
  %1143 = vmatpush1.msra.mxu0 0.0
  %1144 = vmatprep.subr.mxu0 0.0
  %1145 = vmatpush1.msra.mxu0 0.0
  %1146 = vmatprep.subr.mxu0 0.0
  %1147 = vmatpush1.msra.mxu0 0.0
  %1148 = vmatprep.subr.mxu0 0.0
  %1149 = vmatpush1.msra.mxu0 0.0
  %1150 = vmatprep.subr.mxu0 0.0
  %1151 = vmatpush1.msra.mxu0 0.0
  %1152 = vmatprep.subr.mxu0 0.0
  %1153 = vmatpush1.msra.mxu0 0.0
  %1154 = vmatprep.subr.mxu0 0.0
  %1155 = vmatpush1.msra.mxu0 0.0
  %1156 = vmatprep.mubr.f32.mxu0 0.0
  %1157 = vmatmul.mubr.f32.gmra.mrb[0].mxu0 %v1069
  %v1158 = vpop.f32.mrb[0].mxu0
  %v1159 = vadd.f32 %v1066, %v1158
  %v1160 = vpop.f32.mrb[0].mxu0
  %1161 = vmatprep.mubr.f32.mxu0 0.0
  %1162 = vmatmul.mubr.f32.gmra.mrb[0].mxu0 %v1072
  %v1163 = vpop.f32.mrb[0].mxu0
  %v1164 = vadd.f32 %v1066, %v1163
  %v1165 = vpop.f32.mrb[0].mxu0
  %1166 = vmatprep.mubr.f32.mxu0 0.0
  %1167 = vmatmul.mubr.f32.gmra.mrb[0].mxu0 %v1075
  %v1168 = vpop.f32.mrb[0].mxu0
  %v1169 = vadd.f32 %v1066, %v1168
  %v1170 = vpop.f32.mrb[0].mxu0
  %1171 = vmatprep.mubr.f32.mxu0 0.0
  %1172 = vmatmul.mubr.f32.gmra.mrb[0].mxu0 %v1078
  %v1173 = vpop.f32.mrb[0].mxu0
  %v1174 = vadd.f32 %v1066, %v1173
  %v1175 = vpop.f32.mrb[0].mxu0
  %1176 = vmatprep.mubr.f32.mxu0 0.0
  %1177 = vmatmul.mubr.f32.gmra.mrb[0].mxu0 %v1081
  %v1178 = vpop.f32.mrb[0].mxu0
  %v1179 = vadd.f32 %v1066, %v1178
  %v1180 = vpop.f32.mrb[0].mxu0
  %1181 = vmatprep.mubr.f32.mxu0 0.0
  %1182 = vmatmul.mubr.f32.gmra.mrb[0].mxu0 %v1084
  %v1183 = vpop.f32.mrb[0].mxu0
  %v1184 = vadd.f32 %v1066, %v1183
  %v1185 = vpop.f32.mrb[0].mxu0
  %1186 = vmatprep.mubr.f32.mxu0 0.0
  %1187 = vmatmul.mubr.f32.gmra.mrb[0].mxu0 %v1087
  %v1188 = vpop.f32.mrb[0].mxu0
  %v1189 = vadd.f32 %v1066, %v1188
  %v1190 = vpop.f32.mrb[0].mxu0
  %1191 = vmatprep.mubr.f32.mxu0 0.0
  %1192 = vmatmul.mubr.f32.gmra.mrb[0].mxu0 %v1090
  %v1193 = vpop.f32.mrb[0].mxu0
  %v1194 = vadd.f32 %v1066, %v1193
  %v1195 = vpop.f32.mrb[0].mxu0
  %1196 = vdwg.mxu0
  %1197 = vst [vmem:[#allocation3] sm:$0xff] %v1159
  %1198 = vst [vmem:[#allocation3 + $0x8] sm:$0xff] %v1164
  %1199 = vst [vmem:[#allocation3 + $0x10] sm:$0xff] %v1169
  %1200 = vst [vmem:[#allocation3 + $0x18] sm:$0xff] %v1174
  %1201 = vst [vmem:[#allocation3 + $0x20] sm:$0xff] %v1179
  %1202 = vst [vmem:[#allocation3 + $0x28] sm:$0xff] %v1184
  %1203 = vst [vmem:[#allocation3 + $0x30] sm:$0xff] %v1189
  %1204 = vst [vmem:[#allocation3 + $0x38] sm:$0xff] %v1194
  %v1205 = vld [vmem:[%s5] sm:$0xff]
  %v1206 = vld [vmem:[%s5 + $0x8] sm:$0xff]
  %v1207 = vld [vmem:[%s5 + $0x10] sm:$0xff]
  %v1208 = vld [vmem:[%s5 + $0x18] sm:$0xff]
  %s1209 = scalar_lea.vmem %s7, 8
  %v1210 = vld [vmem:[%s1209] sm:$0xff]
  %s1211 = scalar_lea.vmem %s8, 8
  %v1212 = vld [vmem:[%s1211] sm:$0xff]
  %v1213 = vld [vmem:[#allocation3] sm:$0xff]
  %v1215 = vsel %vm214, %v1210, 0
  %1217 = vmatprep.subr.mxu0 0.0
  %1218 = vmatpush1.msra.mxu0 %v1205
  %1219 = vmatprep.subr.mxu0 0.0
  %1220 = vmatpush1.msra.mxu0 %v1206
  %1221 = vmatprep.subr.mxu0 0.0
  %1222 = vmatpush1.msra.mxu0 %v1207
  %1223 = vmatprep.subr.mxu0 0.0
  %1224 = vmatpush1.msra.mxu0 %v1208
  %1225 = vmatprep.subr.mxu0 0.0
  %1226 = vmatpush1.msra.mxu0 0.0
  %1227 = vmatprep.subr.mxu0 0.0
  %1228 = vmatpush1.msra.mxu0 0.0
  %1229 = vmatprep.subr.mxu0 0.0
  %1230 = vmatpush1.msra.mxu0 0.0
  %1231 = vmatprep.subr.mxu0 0.0
  %1232 = vmatpush1.msra.mxu0 0.0
  %1233 = vmatprep.subr.mxu0 0.0
  %1234 = vmatpush1.msra.mxu0 0.0
  %1235 = vmatprep.subr.mxu0 0.0
  %1236 = vmatpush1.msra.mxu0 0.0
  %1237 = vmatprep.subr.mxu0 0.0
  %1238 = vmatpush1.msra.mxu0 0.0
  %1239 = vmatprep.subr.mxu0 0.0
  %1240 = vmatpush1.msra.mxu0 0.0
  %1241 = vmatprep.subr.mxu0 0.0
  %1242 = vmatpush1.msra.mxu0 0.0
  %1243 = vmatprep.subr.mxu0 0.0
  %1244 = vmatpush1.msra.mxu0 0.0
  %1245 = vmatprep.subr.mxu0 0.0
  %1246 = vmatpush1.msra.mxu0 0.0
  %1247 = vmatprep.subr.mxu0 0.0
  %1248 = vmatpush1.msra.mxu0 0.0
  %1249 = vmatprep.subr.mxu0 0.0
  %1250 = vmatpush1.msra.mxu0 0.0
  %1251 = vmatprep.subr.mxu0 0.0
  %1252 = vmatpush1.msra.mxu0 0.0
  %1253 = vmatprep.subr.mxu0 0.0
  %1254 = vmatpush1.msra.mxu0 0.0
  %1255 = vmatprep.subr.mxu0 0.0
  %1256 = vmatpush1.msra.mxu0 0.0
  %1257 = vmatprep.subr.mxu0 0.0
  %1258 = vmatpush1.msra.mxu0 0.0
  %1259 = vmatprep.subr.mxu0 0.0
  %1260 = vmatpush1.msra.mxu0 0.0
  %1261 = vmatprep.subr.mxu0 0.0
  %1262 = vmatpush1.msra.mxu0 0.0
  %1263 = vmatprep.subr.mxu0 0.0
  %1264 = vmatpush1.msra.mxu0 0.0
  %1265 = vmatprep.subr.mxu0 0.0
  %1266 = vmatpush1.msra.mxu0 0.0
  %1267 = vmatprep.subr.mxu0 0.0
  %1268 = vmatpush1.msra.mxu0 0.0
  %1269 = vmatprep.subr.mxu0 0.0
  %1270 = vmatpush1.msra.mxu0 0.0
  %1271 = vmatprep.subr.mxu0 0.0
  %1272 = vmatpush1.msra.mxu0 0.0
  %1273 = vmatprep.subr.mxu0 0.0
  %1274 = vmatpush1.msra.mxu0 0.0
  %1275 = vmatprep.subr.mxu0 0.0
  %1276 = vmatpush1.msra.mxu0 0.0
  %1277 = vmatprep.subr.mxu0 0.0
  %1278 = vmatpush1.msra.mxu0 0.0
  %1279 = vmatprep.subr.mxu0 0.0
  %1280 = vmatpush1.msra.mxu0 0.0
  %1281 = vmatprep.mubr.f32.mxu0 0.0
  %1282 = vmatmul.mubr.f32.gmra.mrb[0].mxu0 %v1215
  %v1283 = vpop.f32.mrb[0].mxu0
  %v1284 = vadd.f32 0.0, %v1283
  %v1285 = vpop.f32.mrb[0].mxu0
  %1286 = vdwg.mxu0
  %v1287 = vadd.f32 %v1213, %v1284
  %v1288 = vxor.u32 %v1287, 2147483648
  %v1289 = vmul.f32 %v1288, 1.442695
  %v1290 = vpow.pop %v1289
  %v1291 = vadd.f32 %v1290, 1.0
  %v1292 = vrcp.pop %v1291
  %v1293 = vmul.f32 1.0, %v1292
  %v1294 = vtanh.pop %v1287
  %1296 = vrot.lane.b32.xlu0 %v1212, 32
  %v1297 = vpop.permute.xlu0 %1296
  %v1299 = vmul.f32 %v1293, %v1297
  %1301 = vrot.lane.b32.xlu0 %v1294, 64
  %v1302 = vpop.permute.xlu0 %1301
  %v1304 = vmul.f32 %v1293, %v1302
  %1306 = vrot.lane.b32.xlu0 %v1304, 32
  %v1307 = vpop.permute.xlu0 %1306
  %v1309 = vadd.f32 %v1299, %v1307
  %v1310 = vtanh.pop %v1309
  %1312 = vrot.lane.b32.xlu0 %v1310, 64
  %v1313 = vpop.permute.xlu0 %1312
  %v1315 = vmul.f32 %v1293, %v1313
  %v1316 = vld [vmem:[#allocation3 + $0x8] sm:$0xff]
  %1318 = vrot.lane.b32.xlu0 %v1315, 32
  %v1319 = vpop.permute.xlu0 %1318
  %v1320 = vsel %vm214, %v1319, 0
  %1322 = vmatprep.subr.mxu0 0.0
  %1323 = vmatpush1.msra.mxu0 %v1205
  %1324 = vmatprep.subr.mxu0 0.0
  %1325 = vmatpush1.msra.mxu0 %v1206
  %1326 = vmatprep.subr.mxu0 0.0
  %1327 = vmatpush1.msra.mxu0 %v1207
  %1328 = vmatprep.subr.mxu0 0.0
  %1329 = vmatpush1.msra.mxu0 %v1208
  %1330 = vmatprep.subr.mxu0 0.0
  %1331 = vmatpush1.msra.mxu0 0.0
  %1332 = vmatprep.subr.mxu0 0.0
  %1333 = vmatpush1.msra.mxu0 0.0
  %1334 = vmatprep.subr.mxu0 0.0
  %1335 = vmatpush1.msra.mxu0 0.0
  %1336 = vmatprep.subr.mxu0 0.0
  %1337 = vmatpush1.msra.mxu0 0.0
  %1338 = vmatprep.subr.mxu0 0.0
  %1339 = vmatpush1.msra.mxu0 0.0
  %1340 = vmatprep.subr.mxu0 0.0
  %1341 = vmatpush1.msra.mxu0 0.0
  %1342 = vmatprep.subr.mxu0 0.0
  %1343 = vmatpush1.msra.mxu0 0.0
  %1344 = vmatprep.subr.mxu0 0.0
  %1345 = vmatpush1.msra.mxu0 0.0
  %1346 = vmatprep.subr.mxu0 0.0
  %1347 = vmatpush1.msra.mxu0 0.0
  %1348 = vmatprep.subr.mxu0 0.0
  %1349 = vmatpush1.msra.mxu0 0.0
  %1350 = vmatprep.subr.mxu0 0.0
  %1351 = vmatpush1.msra.mxu0 0.0
  %1352 = vmatprep.subr.mxu0 0.0
  %1353 = vmatpush1.msra.mxu0 0.0
  %1354 = vmatprep.subr.mxu0 0.0
  %1355 = vmatpush1.msra.mxu0 0.0
  %1356 = vmatprep.subr.mxu0 0.0
  %1357 = vmatpush1.msra.mxu0 0.0
  %1358 = vmatprep.subr.mxu0 0.0
  %1359 = vmatpush1.msra.mxu0 0.0
  %1360 = vmatprep.subr.mxu0 0.0
  %1361 = vmatpush1.msra.mxu0 0.0
  %1362 = vmatprep.subr.mxu0 0.0
  %1363 = vmatpush1.msra.mxu0 0.0
  %1364 = vmatprep.subr.mxu0 0.0
  %1365 = vmatpush1.msra.mxu0 0.0
  %1366 = vmatprep.subr.mxu0 0.0
  %1367 = vmatpush1.msra.mxu0 0.0
  %1368 = vmatprep.subr.mxu0 0.0
  %1369 = vmatpush1.msra.mxu0 0.0
  %1370 = vmatprep.subr.mxu0 0.0
  %1371 = vmatpush1.msra.mxu0 0.0
  %1372 = vmatprep.subr.mxu0 0.0
  %1373 = vmatpush1.msra.mxu0 0.0
  %1374 = vmatprep.subr.mxu0 0.0
  %1375 = vmatpush1.msra.mxu0 0.0
  %1376 = vmatprep.subr.mxu0 0.0
  %1377 = vmatpush1.msra.mxu0 0.0
  %1378 = vmatprep.subr.mxu0 0.0
  %1379 = vmatpush1.msra.mxu0 0.0
  %1380 = vmatprep.subr.mxu0 0.0
  %1381 = vmatpush1.msra.mxu0 0.0
  %1382 = vmatprep.subr.mxu0 0.0
  %1383 = vmatpush1.msra.mxu0 0.0
  %1384 = vmatprep.subr.mxu0 0.0
  %1385 = vmatpush1.msra.mxu0 0.0
  %1386 = vmatprep.mubr.f32.mxu0 0.0
  %1387 = vmatmul.mubr.f32.gmra.mrb[0].mxu0 %v1320
  %v1388 = vpop.f32.mrb[0].mxu0
  %v1389 = vadd.f32 0.0, %v1388
  %v1390 = vpop.f32.mrb[0].mxu0
  %1391 = vdwg.mxu0
  %v1392 = vadd.f32 %v1316, %v1389
  %v1393 = vxor.u32 %v1392, 2147483648
  %v1394 = vmul.f32 %v1393, 1.442695
  %v1395 = vpow.pop %v1394
  %v1396 = vadd.f32 %v1395, 1.0
  %v1397 = vrcp.pop %v1396
  %v1398 = vmul.f32 1.0, %v1397
  %v1399 = vtanh.pop %v1392
  %v1400 = vmul.f32 %v1398, %v1309
  %1402 = vrot.lane.b32.xlu0 %v1399, 64
  %v1403 = vpop.permute.xlu0 %1402
  %v1405 = vmul.f32 %v1398, %v1403
  %1407 = vrot.lane.b32.xlu0 %v1405, 32
  %v1408 = vpop.permute.xlu0 %1407
  %v1410 = vadd.f32 %v1400, %v1408
  %v1411 = vtanh.pop %v1410
  %1413 = vrot.lane.b32.xlu0 %v1411, 64
  %v1414 = vpop.permute.xlu0 %1413
  %v1416 = vmul.f32 %v1398, %v1414
  %v1417 = vld [vmem:[#allocation3 + $0x10] sm:$0xff]
  %1419 = vrot.lane.b32.xlu0 %v1416, 32
  %v1420 = vpop.permute.xlu0 %1419
  %v1421 = vsel %vm214, %v1420, 0
  %1423 = vmatprep.subr.mxu0 0.0
  %1424 = vmatpush1.msra.mxu0 %v1205
  %1425 = vmatprep.subr.mxu0 0.0
  %1426 = vmatpush1.msra.mxu0 %v1206
  %1427 = vmatprep.subr.mxu0 0.0
  %1428 = vmatpush1.msra.mxu0 %v1207
  %1429 = vmatprep.subr.mxu0 0.0
  %1430 = vmatpush1.msra.mxu0 %v1208
  %1431 = vmatprep.subr.mxu0 0.0
  %1432 = vmatpush1.msra.mxu0 0.0
  %1433 = vmatprep.subr.mxu0 0.0
  %1434 = vmatpush1.msra.mxu0 0.0
  %1435 = vmatprep.subr.mxu0 0.0
  %1436 = vmatpush1.msra.mxu0 0.0
  %1437 = vmatprep.subr.mxu0 0.0
  %1438 = vmatpush1.msra.mxu0 0.0
  %1439 = vmatprep.subr.mxu0 0.0
  %1440 = vmatpush1.msra.mxu0 0.0
  %1441 = vmatprep.subr.mxu0 0.0
  %1442 = vmatpush1.msra.mxu0 0.0
  %1443 = vmatprep.subr.mxu0 0.0
  %1444 = vmatpush1.msra.mxu0 0.0
  %1445 = vmatprep.subr.mxu0 0.0
  %1446 = vmatpush1.msra.mxu0 0.0
  %1447 = vmatprep.subr.mxu0 0.0
  %1448 = vmatpush1.msra.mxu0 0.0
  %1449 = vmatprep.subr.mxu0 0.0
  %1450 = vmatpush1.msra.mxu0 0.0
  %1451 = vmatprep.subr.mxu0 0.0
  %1452 = vmatpush1.msra.mxu0 0.0
  %1453 = vmatprep.subr.mxu0 0.0
  %1454 = vmatpush1.msra.mxu0 0.0
  %1455 = vmatprep.subr.mxu0 0.0
  %1456 = vmatpush1.msra.mxu0 0.0
  %1457 = vmatprep.subr.mxu0 0.0
  %1458 = vmatpush1.msra.mxu0 0.0
  %1459 = vmatprep.subr.mxu0 0.0
  %1460 = vmatpush1.msra.mxu0 0.0
  %1461 = vmatprep.subr.mxu0 0.0
  %1462 = vmatpush1.msra.mxu0 0.0
  %1463 = vmatprep.subr.mxu0 0.0
  %1464 = vmatpush1.msra.mxu0 0.0
  %1465 = vmatprep.subr.mxu0 0.0
  %1466 = vmatpush1.msra.mxu0 0.0
  %1467 = vmatprep.subr.mxu0 0.0
  %1468 = vmatpush1.msra.mxu0 0.0
  %1469 = vmatprep.subr.mxu0 0.0
  %1470 = vmatpush1.msra.mxu0 0.0
  %1471 = vmatprep.subr.mxu0 0.0
  %1472 = vmatpush1.msra.mxu0 0.0
  %1473 = vmatprep.subr.mxu0 0.0
  %1474 = vmatpush1.msra.mxu0 0.0
  %1475 = vmatprep.subr.mxu0 0.0
  %1476 = vmatpush1.msra.mxu0 0.0
  %1477 = vmatprep.subr.mxu0 0.0
  %1478 = vmatpush1.msra.mxu0 0.0
  %1479 = vmatprep.subr.mxu0 0.0
  %1480 = vmatpush1.msra.mxu0 0.0
  %1481 = vmatprep.subr.mxu0 0.0
  %1482 = vmatpush1.msra.mxu0 0.0
  %1483 = vmatprep.subr.mxu0 0.0
  %1484 = vmatpush1.msra.mxu0 0.0
  %1485 = vmatprep.subr.mxu0 0.0
  %1486 = vmatpush1.msra.mxu0 0.0
  %1487 = vmatprep.mubr.f32.mxu0 0.0
  %1488 = vmatmul.mubr.f32.gmra.mrb[0].mxu0 %v1421
  %v1489 = vpop.f32.mrb[0].mxu0
  %v1490 = vadd.f32 0.0, %v1489
  %v1491 = vpop.f32.mrb[0].mxu0
  %1492 = vdwg.mxu0
  %v1493 = vadd.f32 %v1417, %v1490
  %v1494 = vxor.u32 %v1493, 2147483648
  %v1495 = vmul.f32 %v1494, 1.442695
  %v1496 = vpow.pop %v1495
  %v1497 = vadd.f32 %v1496, 1.0
  %v1498 = vrcp.pop %v1497
  %v1499 = vmul.f32 1.0, %v1498
  %v1500 = vtanh.pop %v1493
  %v1501 = vmul.f32 %v1499, %v1410
  %1503 = vrot.lane.b32.xlu0 %v1500, 64
  %v1504 = vpop.permute.xlu0 %1503
  %v1506 = vmul.f32 %v1499, %v1504
  %1508 = vrot.lane.b32.xlu0 %v1506, 32
  %v1509 = vpop.permute.xlu0 %1508
  %v1511 = vadd.f32 %v1501, %v1509
  %v1512 = vtanh.pop %v1511
  %1514 = vrot.lane.b32.xlu0 %v1512, 64
  %v1515 = vpop.permute.xlu0 %1514
  %v1517 = vmul.f32 %v1499, %v1515
  %v1518 = vld [vmem:[#allocation3 + $0x18] sm:$0xff]
  %1520 = vrot.lane.b32.xlu0 %v1517, 32
  %v1521 = vpop.permute.xlu0 %1520
  %v1522 = vsel %vm214, %v1521, 0
  %1524 = vmatprep.subr.mxu0 0.0
  %1525 = vmatpush1.msra.mxu0 %v1205
  %1526 = vmatprep.subr.mxu0 0.0
  %1527 = vmatpush1.msra.mxu0 %v1206
  %1528 = vmatprep.subr.mxu0 0.0
  %1529 = vmatpush1.msra.mxu0 %v1207
  %1530 = vmatprep.subr.mxu0 0.0
  %1531 = vmatpush1.msra.mxu0 %v1208
  %1532 = vmatprep.subr.mxu0 0.0
  %1533 = vmatpush1.msra.mxu0 0.0
  %1534 = vmatprep.subr.mxu0 0.0
  %1535 = vmatpush1.msra.mxu0 0.0
  %1536 = vmatprep.subr.mxu0 0.0
  %1537 = vmatpush1.msra.mxu0 0.0
  %1538 = vmatprep.subr.mxu0 0.0
  %1539 = vmatpush1.msra.mxu0 0.0
  %1540 = vmatprep.subr.mxu0 0.0
  %1541 = vmatpush1.msra.mxu0 0.0
  %1542 = vmatprep.subr.mxu0 0.0
  %1543 = vmatpush1.msra.mxu0 0.0
  %1544 = vmatprep.subr.mxu0 0.0
  %1545 = vmatpush1.msra.mxu0 0.0
  %1546 = vmatprep.subr.mxu0 0.0
  %1547 = vmatpush1.msra.mxu0 0.0
  %1548 = vmatprep.subr.mxu0 0.0
  %1549 = vmatpush1.msra.mxu0 0.0
  %1550 = vmatprep.subr.mxu0 0.0
  %1551 = vmatpush1.msra.mxu0 0.0
  %1552 = vmatprep.subr.mxu0 0.0
  %1553 = vmatpush1.msra.mxu0 0.0
  %1554 = vmatprep.subr.mxu0 0.0
  %1555 = vmatpush1.msra.mxu0 0.0
  %1556 = vmatprep.subr.mxu0 0.0
  %1557 = vmatpush1.msra.mxu0 0.0
  %1558 = vmatprep.subr.mxu0 0.0
  %1559 = vmatpush1.msra.mxu0 0.0
  %1560 = vmatprep.subr.mxu0 0.0
  %1561 = vmatpush1.msra.mxu0 0.0
  %1562 = vmatprep.subr.mxu0 0.0
  %1563 = vmatpush1.msra.mxu0 0.0
  %1564 = vmatprep.subr.mxu0 0.0
  %1565 = vmatpush1.msra.mxu0 0.0
  %1566 = vmatprep.subr.mxu0 0.0
  %1567 = vmatpush1.msra.mxu0 0.0
  %1568 = vmatprep.subr.mxu0 0.0
  %1569 = vmatpush1.msra.mxu0 0.0
  %1570 = vmatprep.subr.mxu0 0.0
  %1571 = vmatpush1.msra.mxu0 0.0
  %1572 = vmatprep.subr.mxu0 0.0
  %1573 = vmatpush1.msra.mxu0 0.0
  %1574 = vmatprep.subr.mxu0 0.0
  %1575 = vmatpush1.msra.mxu0 0.0
  %1576 = vmatprep.subr.mxu0 0.0
  %1577 = vmatpush1.msra.mxu0 0.0
  %1578 = vmatprep.subr.mxu0 0.0
  %1579 = vmatpush1.msra.mxu0 0.0
  %1580 = vmatprep.subr.mxu0 0.0
  %1581 = vmatpush1.msra.mxu0 0.0
  %1582 = vmatprep.subr.mxu0 0.0
  %1583 = vmatpush1.msra.mxu0 0.0
  %1584 = vmatprep.subr.mxu0 0.0
  %1585 = vmatpush1.msra.mxu0 0.0
  %1586 = vmatprep.subr.mxu0 0.0
  %1587 = vmatpush1.msra.mxu0 0.0
  %1588 = vmatprep.mubr.f32.mxu0 0.0
  %1589 = vmatmul.mubr.f32.gmra.mrb[0].mxu0 %v1522
  %v1590 = vpop.f32.mrb[0].mxu0
  %v1591 = vadd.f32 0.0, %v1590
  %v1592 = vpop.f32.mrb[0].mxu0
  %1593 = vdwg.mxu0
  %v1594 = vadd.f32 %v1518, %v1591
  %v1595 = vxor.u32 %v1594, 2147483648
  %v1596 = vmul.f32 %v1595, 1.442695
  %v1597 = vpow.pop %v1596
  %v1598 = vadd.f32 %v1597, 1.0
  %v1599 = vrcp.pop %v1598
  %v1600 = vmul.f32 1.0, %v1599
  %v1601 = vtanh.pop %v1594
  %v1602 = vmul.f32 %v1600, %v1511
  %1604 = vrot.lane.b32.xlu0 %v1601, 64
  %v1605 = vpop.permute.xlu0 %1604
  %v1607 = vmul.f32 %v1600, %v1605
  %1609 = vrot.lane.b32.xlu0 %v1607, 32
  %v1610 = vpop.permute.xlu0 %1609
  %v1612 = vadd.f32 %v1602, %v1610
  %v1613 = vtanh.pop %v1612
  %1615 = vrot.lane.b32.xlu0 %v1613, 64
  %v1616 = vpop.permute.xlu0 %1615
  %v1618 = vmul.f32 %v1600, %v1616
  %v1619 = vld [vmem:[#allocation3 + $0x20] sm:$0xff]
  %1621 = vrot.lane.b32.xlu0 %v1618, 32
  %v1622 = vpop.permute.xlu0 %1621
  %v1623 = vsel %vm214, %v1622, 0
  %1625 = vmatprep.subr.mxu0 0.0
  %1626 = vmatpush1.msra.mxu0 %v1205
  %1627 = vmatprep.subr.mxu0 0.0
  %1628 = vmatpush1.msra.mxu0 %v1206
  %1629 = vmatprep.subr.mxu0 0.0
  %1630 = vmatpush1.msra.mxu0 %v1207
  %1631 = vmatprep.subr.mxu0 0.0
  %1632 = vmatpush1.msra.mxu0 %v1208
  %1633 = vmatprep.subr.mxu0 0.0
  %1634 = vmatpush1.msra.mxu0 0.0
  %1635 = vmatprep.subr.mxu0 0.0
  %1636 = vmatpush1.msra.mxu0 0.0
  %1637 = vmatprep.subr.mxu0 0.0
  %1638 = vmatpush1.msra.mxu0 0.0
  %1639 = vmatprep.subr.mxu0 0.0
  %1640 = vmatpush1.msra.mxu0 0.0
  %1641 = vmatprep.subr.mxu0 0.0
  %1642 = vmatpush1.msra.mxu0 0.0
  %1643 = vmatprep.subr.mxu0 0.0
  %1644 = vmatpush1.msra.mxu0 0.0
  %1645 = vmatprep.subr.mxu0 0.0
  %1646 = vmatpush1.msra.mxu0 0.0
  %1647 = vmatprep.subr.mxu0 0.0
  %1648 = vmatpush1.msra.mxu0 0.0
  %1649 = vmatprep.subr.mxu0 0.0
  %1650 = vmatpush1.msra.mxu0 0.0
  %1651 = vmatprep.subr.mxu0 0.0
  %1652 = vmatpush1.msra.mxu0 0.0
  %1653 = vmatprep.subr.mxu0 0.0
  %1654 = vmatpush1.msra.mxu0 0.0
  %1655 = vmatprep.subr.mxu0 0.0
  %1656 = vmatpush1.msra.mxu0 0.0
  %1657 = vmatprep.subr.mxu0 0.0
  %1658 = vmatpush1.msra.mxu0 0.0
  %1659 = vmatprep.subr.mxu0 0.0
  %1660 = vmatpush1.msra.mxu0 0.0
  %1661 = vmatprep.subr.mxu0 0.0
  %1662 = vmatpush1.msra.mxu0 0.0
  %1663 = vmatprep.subr.mxu0 0.0
  %1664 = vmatpush1.msra.mxu0 0.0
  %1665 = vmatprep.subr.mxu0 0.0
  %1666 = vmatpush1.msra.mxu0 0.0
  %1667 = vmatprep.subr.mxu0 0.0
  %1668 = vmatpush1.msra.mxu0 0.0
  %1669 = vmatprep.subr.mxu0 0.0
  %1670 = vmatpush1.msra.mxu0 0.0
  %1671 = vmatprep.subr.mxu0 0.0
  %1672 = vmatpush1.msra.mxu0 0.0
  %1673 = vmatprep.subr.mxu0 0.0
  %1674 = vmatpush1.msra.mxu0 0.0
  %1675 = vmatprep.subr.mxu0 0.0
  %1676 = vmatpush1.msra.mxu0 0.0
  %1677 = vmatprep.subr.mxu0 0.0
  %1678 = vmatpush1.msra.mxu0 0.0
  %1679 = vmatprep.subr.mxu0 0.0
  %1680 = vmatpush1.msra.mxu0 0.0
  %1681 = vmatprep.subr.mxu0 0.0
  %1682 = vmatpush1.msra.mxu0 0.0
  %1683 = vmatprep.subr.mxu0 0.0
  %1684 = vmatpush1.msra.mxu0 0.0
  %1685 = vmatprep.subr.mxu0 0.0
  %1686 = vmatpush1.msra.mxu0 0.0
  %1687 = vmatprep.subr.mxu0 0.0
  %1688 = vmatpush1.msra.mxu0 0.0
  %1689 = vmatprep.mubr.f32.mxu0 0.0
  %1690 = vmatmul.mubr.f32.gmra.mrb[0].mxu0 %v1623
  %v1691 = vpop.f32.mrb[0].mxu0
  %v1692 = vadd.f32 0.0, %v1691
  %v1693 = vpop.f32.mrb[0].mxu0
  %1694 = vdwg.mxu0
  %v1695 = vadd.f32 %v1619, %v1692
  %v1696 = vxor.u32 %v1695, 2147483648
  %v1697 = vmul.f32 %v1696, 1.442695
  %v1698 = vpow.pop %v1697
  %v1699 = vadd.f32 %v1698, 1.0
  %v1700 = vrcp.pop %v1699
  %v1701 = vmul.f32 1.0, %v1700
  %v1702 = vtanh.pop %v1695
  %v1703 = vmul.f32 %v1701, %v1612
  %1705 = vrot.lane.b32.xlu0 %v1702, 64
  %v1706 = vpop.permute.xlu0 %1705
  %v1708 = vmul.f32 %v1701, %v1706
  %1710 = vrot.lane.b32.xlu0 %v1708, 32
  %v1711 = vpop.permute.xlu0 %1710
  %v1713 = vadd.f32 %v1703, %v1711
  %v1714 = vtanh.pop %v1713
  %1716 = vrot.lane.b32.xlu0 %v1714, 64
  %v1717 = vpop.permute.xlu0 %1716
  %v1719 = vmul.f32 %v1701, %v1717
  %v1720 = vld [vmem:[#allocation3 + $0x28] sm:$0xff]
  %1722 = vrot.lane.b32.xlu0 %v1719, 32
  %v1723 = vpop.permute.xlu0 %1722
  %v1724 = vsel %vm214, %v1723, 0
  %1726 = vmatprep.subr.mxu0 0.0
  %1727 = vmatpush1.msra.mxu0 %v1205
  %1728 = vmatprep.subr.mxu0 0.0
  %1729 = vmatpush1.msra.mxu0 %v1206
  %1730 = vmatprep.subr.mxu0 0.0
  %1731 = vmatpush1.msra.mxu0 %v1207
  %1732 = vmatprep.subr.mxu0 0.0
  %1733 = vmatpush1.msra.mxu0 %v1208
  %1734 = vmatprep.subr.mxu0 0.0
  %1735 = vmatpush1.msra.mxu0 0.0
  %1736 = vmatprep.subr.mxu0 0.0
  %1737 = vmatpush1.msra.mxu0 0.0
  %1738 = vmatprep.subr.mxu0 0.0
  %1739 = vmatpush1.msra.mxu0 0.0
  %1740 = vmatprep.subr.mxu0 0.0
  %1741 = vmatpush1.msra.mxu0 0.0
  %1742 = vmatprep.subr.mxu0 0.0
  %1743 = vmatpush1.msra.mxu0 0.0
  %1744 = vmatprep.subr.mxu0 0.0
  %1745 = vmatpush1.msra.mxu0 0.0
  %1746 = vmatprep.subr.mxu0 0.0
  %1747 = vmatpush1.msra.mxu0 0.0
  %1748 = vmatprep.subr.mxu0 0.0
  %1749 = vmatpush1.msra.mxu0 0.0
  %1750 = vmatprep.subr.mxu0 0.0
  %1751 = vmatpush1.msra.mxu0 0.0
  %1752 = vmatprep.subr.mxu0 0.0
  %1753 = vmatpush1.msra.mxu0 0.0
  %1754 = vmatprep.subr.mxu0 0.0
  %1755 = vmatpush1.msra.mxu0 0.0
  %1756 = vmatprep.subr.mxu0 0.0
  %1757 = vmatpush1.msra.mxu0 0.0
  %1758 = vmatprep.subr.mxu0 0.0
  %1759 = vmatpush1.msra.mxu0 0.0
  %1760 = vmatprep.subr.mxu0 0.0
  %1761 = vmatpush1.msra.mxu0 0.0
  %1762 = vmatprep.subr.mxu0 0.0
  %1763 = vmatpush1.msra.mxu0 0.0
  %1764 = vmatprep.subr.mxu0 0.0
  %1765 = vmatpush1.msra.mxu0 0.0
  %1766 = vmatprep.subr.mxu0 0.0
  %1767 = vmatpush1.msra.mxu0 0.0
  %1768 = vmatprep.subr.mxu0 0.0
  %1769 = vmatpush1.msra.mxu0 0.0
  %1770 = vmatprep.subr.mxu0 0.0
  %1771 = vmatpush1.msra.mxu0 0.0
  %1772 = vmatprep.subr.mxu0 0.0
  %1773 = vmatpush1.msra.mxu0 0.0
  %1774 = vmatprep.subr.mxu0 0.0
  %1775 = vmatpush1.msra.mxu0 0.0
  %1776 = vmatprep.subr.mxu0 0.0
  %1777 = vmatpush1.msra.mxu0 0.0
  %1778 = vmatprep.subr.mxu0 0.0
  %1779 = vmatpush1.msra.mxu0 0.0
  %1780 = vmatprep.subr.mxu0 0.0
  %1781 = vmatpush1.msra.mxu0 0.0
  %1782 = vmatprep.subr.mxu0 0.0
  %1783 = vmatpush1.msra.mxu0 0.0
  %1784 = vmatprep.subr.mxu0 0.0
  %1785 = vmatpush1.msra.mxu0 0.0
  %1786 = vmatprep.subr.mxu0 0.0
  %1787 = vmatpush1.msra.mxu0 0.0
  %1788 = vmatprep.subr.mxu0 0.0
  %1789 = vmatpush1.msra.mxu0 0.0
  %1790 = vmatprep.mubr.f32.mxu0 0.0
  %1791 = vmatmul.mubr.f32.gmra.mrb[0].mxu0 %v1724
  %v1792 = vpop.f32.mrb[0].mxu0
  %v1793 = vadd.f32 0.0, %v1792
  %v1794 = vpop.f32.mrb[0].mxu0
  %1795 = vdwg.mxu0
  %v1796 = vadd.f32 %v1720, %v1793
  %v1797 = vxor.u32 %v1796, 2147483648
  %v1798 = vmul.f32 %v1797, 1.442695
  %v1799 = vpow.pop %v1798
  %v1800 = vadd.f32 %v1799, 1.0
  %v1801 = vrcp.pop %v1800
  %v1802 = vmul.f32 1.0, %v1801
  %v1803 = vtanh.pop %v1796
  %v1804 = vmul.f32 %v1802, %v1713
  %1806 = vrot.lane.b32.xlu0 %v1803, 64
  %v1807 = vpop.permute.xlu0 %1806
  %v1809 = vmul.f32 %v1802, %v1807
  %1811 = vrot.lane.b32.xlu0 %v1809, 32
  %v1812 = vpop.permute.xlu0 %1811
  %v1814 = vadd.f32 %v1804, %v1812
  %v1815 = vtanh.pop %v1814
  %1817 = vrot.lane.b32.xlu0 %v1815, 64
  %v1818 = vpop.permute.xlu0 %1817
  %v1820 = vmul.f32 %v1802, %v1818
  %v1821 = vld [vmem:[#allocation3 + $0x30] sm:$0xff]
  %1823 = vrot.lane.b32.xlu0 %v1820, 32
  %v1824 = vpop.permute.xlu0 %1823
  %v1825 = vsel %vm214, %v1824, 0
  %1827 = vmatprep.subr.mxu0 0.0
  %1828 = vmatpush1.msra.mxu0 %v1205
  %1829 = vmatprep.subr.mxu0 0.0
  %1830 = vmatpush1.msra.mxu0 %v1206
  %1831 = vmatprep.subr.mxu0 0.0
  %1832 = vmatpush1.msra.mxu0 %v1207
  %1833 = vmatprep.subr.mxu0 0.0
  %1834 = vmatpush1.msra.mxu0 %v1208
  %1835 = vmatprep.subr.mxu0 0.0
  %1836 = vmatpush1.msra.mxu0 0.0
  %1837 = vmatprep.subr.mxu0 0.0
  %1838 = vmatpush1.msra.mxu0 0.0
  %1839 = vmatprep.subr.mxu0 0.0
  %1840 = vmatpush1.msra.mxu0 0.0
  %1841 = vmatprep.subr.mxu0 0.0
  %1842 = vmatpush1.msra.mxu0 0.0
  %1843 = vmatprep.subr.mxu0 0.0
  %1844 = vmatpush1.msra.mxu0 0.0
  %1845 = vmatprep.subr.mxu0 0.0
  %1846 = vmatpush1.msra.mxu0 0.0
  %1847 = vmatprep.subr.mxu0 0.0
  %1848 = vmatpush1.msra.mxu0 0.0
  %1849 = vmatprep.subr.mxu0 0.0
  %1850 = vmatpush1.msra.mxu0 0.0
  %1851 = vmatprep.subr.mxu0 0.0
  %1852 = vmatpush1.msra.mxu0 0.0
  %1853 = vmatprep.subr.mxu0 0.0
  %1854 = vmatpush1.msra.mxu0 0.0
  %1855 = vmatprep.subr.mxu0 0.0
  %1856 = vmatpush1.msra.mxu0 0.0
  %1857 = vmatprep.subr.mxu0 0.0
  %1858 = vmatpush1.msra.mxu0 0.0
  %1859 = vmatprep.subr.mxu0 0.0
  %1860 = vmatpush1.msra.mxu0 0.0
  %1861 = vmatprep.subr.mxu0 0.0
  %1862 = vmatpush1.msra.mxu0 0.0
  %1863 = vmatprep.subr.mxu0 0.0
  %1864 = vmatpush1.msra.mxu0 0.0
  %1865 = vmatprep.subr.mxu0 0.0
  %1866 = vmatpush1.msra.mxu0 0.0
  %1867 = vmatprep.subr.mxu0 0.0
  %1868 = vmatpush1.msra.mxu0 0.0
  %1869 = vmatprep.subr.mxu0 0.0
  %1870 = vmatpush1.msra.mxu0 0.0
  %1871 = vmatprep.subr.mxu0 0.0
  %1872 = vmatpush1.msra.mxu0 0.0
  %1873 = vmatprep.subr.mxu0 0.0
  %1874 = vmatpush1.msra.mxu0 0.0
  %1875 = vmatprep.subr.mxu0 0.0
  %1876 = vmatpush1.msra.mxu0 0.0
  %1877 = vmatprep.subr.mxu0 0.0
  %1878 = vmatpush1.msra.mxu0 0.0
  %1879 = vmatprep.subr.mxu0 0.0
  %1880 = vmatpush1.msra.mxu0 0.0
  %1881 = vmatprep.subr.mxu0 0.0
  %1882 = vmatpush1.msra.mxu0 0.0
  %1883 = vmatprep.subr.mxu0 0.0
  %1884 = vmatpush1.msra.mxu0 0.0
  %1885 = vmatprep.subr.mxu0 0.0
  %1886 = vmatpush1.msra.mxu0 0.0
  %1887 = vmatprep.subr.mxu0 0.0
  %1888 = vmatpush1.msra.mxu0 0.0
  %1889 = vmatprep.subr.mxu0 0.0
  %1890 = vmatpush1.msra.mxu0 0.0
  %1891 = vmatprep.mubr.f32.mxu0 0.0
  %1892 = vmatmul.mubr.f32.gmra.mrb[0].mxu0 %v1825
  %v1893 = vpop.f32.mrb[0].mxu0
  %v1894 = vadd.f32 0.0, %v1893
  %v1895 = vpop.f32.mrb[0].mxu0
  %1896 = vdwg.mxu0
  %v1897 = vadd.f32 %v1821, %v1894
  %v1898 = vxor.u32 %v1897, 2147483648
  %v1899 = vmul.f32 %v1898, 1.442695
  %v1900 = vpow.pop %v1899
  %v1901 = vadd.f32 %v1900, 1.0
  %v1902 = vrcp.pop %v1901
  %v1903 = vmul.f32 1.0, %v1902
  %v1904 = vtanh.pop %v1897
  %v1905 = vmul.f32 %v1903, %v1814
  %1907 = vrot.lane.b32.xlu0 %v1904, 64
  %v1908 = vpop.permute.xlu0 %1907
  %v1910 = vmul.f32 %v1903, %v1908
  %1912 = vrot.lane.b32.xlu0 %v1910, 32
  %v1913 = vpop.permute.xlu0 %1912
  %v1915 = vadd.f32 %v1905, %v1913
  %v1916 = vtanh.pop %v1915
  %1918 = vrot.lane.b32.xlu0 %v1916, 64
  %v1919 = vpop.permute.xlu0 %1918
  %v1921 = vmul.f32 %v1903, %v1919
  %v1922 = vld [vmem:[#allocation3 + $0x38] sm:$0xff]
  %1924 = vrot.lane.b32.xlu0 %v1921, 32
  %v1925 = vpop.permute.xlu0 %1924
  %v1926 = vsel %vm214, %v1925, 0
  %1928 = vmatprep.subr.mxu0 0.0
  %1929 = vmatpush1.msra.mxu0 %v1205
  %1930 = vmatprep.subr.mxu0 0.0
  %1931 = vmatpush1.msra.mxu0 %v1206
  %1932 = vmatprep.subr.mxu0 0.0
  %1933 = vmatpush1.msra.mxu0 %v1207
  %1934 = vmatprep.subr.mxu0 0.0
  %1935 = vmatpush1.msra.mxu0 %v1208
  %1936 = vmatprep.subr.mxu0 0.0
  %1937 = vmatpush1.msra.mxu0 0.0
  %1938 = vmatprep.subr.mxu0 0.0
  %1939 = vmatpush1.msra.mxu0 0.0
  %1940 = vmatprep.subr.mxu0 0.0
  %1941 = vmatpush1.msra.mxu0 0.0
  %1942 = vmatprep.subr.mxu0 0.0
  %1943 = vmatpush1.msra.mxu0 0.0
  %1944 = vmatprep.subr.mxu0 0.0
  %1945 = vmatpush1.msra.mxu0 0.0
  %1946 = vmatprep.subr.mxu0 0.0
  %1947 = vmatpush1.msra.mxu0 0.0
  %1948 = vmatprep.subr.mxu0 0.0
  %1949 = vmatpush1.msra.mxu0 0.0
  %1950 = vmatprep.subr.mxu0 0.0
  %1951 = vmatpush1.msra.mxu0 0.0
  %1952 = vmatprep.subr.mxu0 0.0
  %1953 = vmatpush1.msra.mxu0 0.0
  %1954 = vmatprep.subr.mxu0 0.0
  %1955 = vmatpush1.msra.mxu0 0.0
  %1956 = vmatprep.subr.mxu0 0.0
  %1957 = vmatpush1.msra.mxu0 0.0
  %1958 = vmatprep.subr.mxu0 0.0
  %1959 = vmatpush1.msra.mxu0 0.0
  %1960 = vmatprep.subr.mxu0 0.0
  %1961 = vmatpush1.msra.mxu0 0.0
  %1962 = vmatprep.subr.mxu0 0.0
  %1963 = vmatpush1.msra.mxu0 0.0
  %1964 = vmatprep.subr.mxu0 0.0
  %1965 = vmatpush1.msra.mxu0 0.0
  %1966 = vmatprep.subr.mxu0 0.0
  %1967 = vmatpush1.msra.mxu0 0.0
  %1968 = vmatprep.subr.mxu0 0.0
  %1969 = vmatpush1.msra.mxu0 0.0
  %1970 = vmatprep.subr.mxu0 0.0
  %1971 = vmatpush1.msra.mxu0 0.0
  %1972 = vmatprep.subr.mxu0 0.0
  %1973 = vmatpush1.msra.mxu0 0.0
  %1974 = vmatprep.subr.mxu0 0.0
  %1975 = vmatpush1.msra.mxu0 0.0
  %1976 = vmatprep.subr.mxu0 0.0
  %1977 = vmatpush1.msra.mxu0 0.0
  %1978 = vmatprep.subr.mxu0 0.0
  %1979 = vmatpush1.msra.mxu0 0.0
  %1980 = vmatprep.subr.mxu0 0.0
  %1981 = vmatpush1.msra.mxu0 0.0
  %1982 = vmatprep.subr.mxu0 0.0
  %1983 = vmatpush1.msra.mxu0 0.0
  %1984 = vmatprep.subr.mxu0 0.0
  %1985 = vmatpush1.msra.mxu0 0.0
  %1986 = vmatprep.subr.mxu0 0.0
  %1987 = vmatpush1.msra.mxu0 0.0
  %1988 = vmatprep.subr.mxu0 0.0
  %1989 = vmatpush1.msra.mxu0 0.0
  %1990 = vmatprep.subr.mxu0 0.0
  %1991 = vmatpush1.msra.mxu0 0.0
  %1992 = vmatprep.mubr.f32.mxu0 0.0
  %1993 = vmatmul.mubr.f32.gmra.mrb[0].mxu0 %v1926
  %v1994 = vpop.f32.mrb[0].mxu0
  %v1995 = vadd.f32 0.0, %v1994
  %v1996 = vpop.f32.mrb[0].mxu0
  %1997 = vdwg.mxu0
  %v1998 = vadd.f32 %v1922, %v1995
  %v1999 = vxor.u32 %v1998, 2147483648
  %v2000 = vmul.f32 %v1999, 1.442695
  %v2001 = vpow.pop %v2000
  %v2002 = vadd.f32 %v2001, 1.0
  %v2003 = vrcp.pop %v2002
  %v2004 = vmul.f32 1.0, %v2003
  %v2005 = vtanh.pop %v1998
  %v2006 = vmul.f32 %v2004, %v1915
  %2008 = vrot.lane.b32.xlu0 %v2005, 64
  %v2009 = vpop.permute.xlu0 %2008
  %v2011 = vmul.f32 %v2004, %v2009
  %2013 = vrot.lane.b32.xlu0 %v2011, 32
  %v2014 = vpop.permute.xlu0 %2013
  %v2016 = vadd.f32 %v2006, %v2014
  %v2017 = vtanh.pop %v2016
  %2019 = vrot.lane.b32.xlu0 %v2017, 64
  %v2020 = vpop.permute.xlu0 %2019
  %v2022 = vmul.f32 %v2004, %v2020
  %2024 = vrot.lane.b32.xlu0 %v2022, 32
  %v2025 = vpop.permute.xlu0 %2024
  %s2027 = scalar_lea.vmem %s15, 8
  %2028 = vst.msk [vmem:[%s2027] sm:$0xff] %vm214, %v2025
  %2030 = vrot.lane.b32.xlu0 %v2016, 96
  %v2031 = vpop.permute.xlu0 %2030
  %s2033 = scalar_lea.vmem %s16, 8
  %2034 = vst.msk [vmem:[%s2033] sm:$0xff] %vm214, %v2031
  %v2035 = vld [vmem:[%s9] sm:$0xff]
  %v2036 = vld [vmem:[%s9 + $0x8] sm:$0xff]
  %v2037 = vld [vmem:[%s9 + $0x10] sm:$0xff]
  %v2038 = vld [vmem:[%s9 + $0x18] sm:$0xff]
  %v2039 = vld [vmem:[%s10] sm:$0x1]
  %v2041 = vlaneseq
  %v2042 = vshrl.u32 %v2041, 7
  %v2043 = vsub.s32 0, %v2042
  %v2044 = vrot.slane %v2039, %v2043
  %v2046 = vsel %vm214, %v2025, 0
  %2048 = vmatprep.subr.mxu0 0.0
  %2049 = vmatpush1.msra.mxu0 %v2035
  %2050 = vmatprep.subr.mxu0 0.0
  %2051 = vmatpush1.msra.mxu0 %v2036
  %2052 = vmatprep.subr.mxu0 0.0
  %2053 = vmatpush1.msra.mxu0 %v2037
  %2054 = vmatprep.subr.mxu0 0.0
  %2055 = vmatpush1.msra.mxu0 %v2038
  %2056 = vmatprep.subr.mxu0 0.0
  %2057 = vmatpush1.msra.mxu0 0.0
  %2058 = vmatprep.subr.mxu0 0.0
  %2059 = vmatpush1.msra.mxu0 0.0
  %2060 = vmatprep.subr.mxu0 0.0
  %2061 = vmatpush1.msra.mxu0 0.0
  %2062 = vmatprep.subr.mxu0 0.0
  %2063 = vmatpush1.msra.mxu0 0.0
  %2064 = vmatprep.subr.mxu0 0.0
  %2065 = vmatpush1.msra.mxu0 0.0
  %2066 = vmatprep.subr.mxu0 0.0
  %2067 = vmatpush1.msra.mxu0 0.0
  %2068 = vmatprep.subr.mxu0 0.0
  %2069 = vmatpush1.msra.mxu0 0.0
  %2070 = vmatprep.subr.mxu0 0.0
  %2071 = vmatpush1.msra.mxu0 0.0
  %2072 = vmatprep.subr.mxu0 0.0
  %2073 = vmatpush1.msra.mxu0 0.0
  %2074 = vmatprep.subr.mxu0 0.0
  %2075 = vmatpush1.msra.mxu0 0.0
  %2076 = vmatprep.subr.mxu0 0.0
  %2077 = vmatpush1.msra.mxu0 0.0
  %2078 = vmatprep.subr.mxu0 0.0
  %2079 = vmatpush1.msra.mxu0 0.0
  %2080 = vmatprep.subr.mxu0 0.0
  %2081 = vmatpush1.msra.mxu0 0.0
  %2082 = vmatprep.subr.mxu0 0.0
  %2083 = vmatpush1.msra.mxu0 0.0
  %2084 = vmatprep.subr.mxu0 0.0
  %2085 = vmatpush1.msra.mxu0 0.0
  %2086 = vmatprep.subr.mxu0 0.0
  %2087 = vmatpush1.msra.mxu0 0.0
  %2088 = vmatprep.subr.mxu0 0.0
  %2089 = vmatpush1.msra.mxu0 0.0
  %2090 = vmatprep.subr.mxu0 0.0
  %2091 = vmatpush1.msra.mxu0 0.0
  %2092 = vmatprep.subr.mxu0 0.0
  %2093 = vmatpush1.msra.mxu0 0.0
  %2094 = vmatprep.subr.mxu0 0.0
  %2095 = vmatpush1.msra.mxu0 0.0
  %2096 = vmatprep.subr.mxu0 0.0
  %2097 = vmatpush1.msra.mxu0 0.0
  %2098 = vmatprep.subr.mxu0 0.0
  %2099 = vmatpush1.msra.mxu0 0.0
  %2100 = vmatprep.subr.mxu0 0.0
  %2101 = vmatpush1.msra.mxu0 0.0
  %2102 = vmatprep.subr.mxu0 0.0
  %2103 = vmatpush1.msra.mxu0 0.0
  %2104 = vmatprep.subr.mxu0 0.0
  %2105 = vmatpush1.msra.mxu0 0.0
  %2106 = vmatprep.subr.mxu0 0.0
  %2107 = vmatpush1.msra.mxu0 0.0
  %2108 = vmatprep.subr.mxu0 0.0
  %2109 = vmatpush1.msra.mxu0 0.0
  %2110 = vmatprep.subr.mxu0 0.0
  %2111 = vmatpush1.msra.mxu0 0.0
  %2112 = vmatprep.mubr.f32.mxu0 0.0
  %2113 = vmatmul.mubr.f32.gmra.mrb[0].mxu0 %v2046
  %v2114 = vpop.f32.mrb[0].mxu0
  %v2115 = vadd.f32 %v2044, %v2114
  %v2116 = vpop.f32.mrb[0].mxu0
  %2117 = vdwg.mxu0
  %v2118 = vtanh.pop %v2115
  %v2119 = vld [vmem:[%s13] sm:$0xff]
  %v2120 = vmul.f32 %v2118, %v2119
  %v2121 = vld [vmem:[%s11] sm:$0x1]
  %v2123 = vlaneseq
  %v2124 = vshrl.u32 %v2123, 7
  %v2125 = vsub.s32 0, %v2124
  %v2126 = vrot.slane %v2121, %v2125
  %v2128 = vmul.f32 %v2120, %v2126
  %v2129 = vsel %vm69, %v2128, 0.0
  %2130 = vadd.xlane.f32.xlu0 %v2129
  %v2131 = vpop.xlane.xlu0 %2130
  %v2132 = vld [vmem:[#allocation4] sm:$0x1]
  %v2134 = vlaneseq
  %v2135 = vshrl.u32 %v2134, 7
  %v2136 = vsub.s32 0, %v2135
  %v2137 = vrot.slane %v2132, %v2136
  %v2139 = vadd.f32 %v2131, %v2137
  %vm2140 = vcmask 7168
  %2141 = vst.msk [vmem:[%s14] sm:$0xff] %vm2140, %v2139
  // Predicated region
  $region58: #{rnn_predictor_forward.1} parent=0 // pred_check
    _
  $region59: #{rnn_predictor_forward.1} parent=0 // pred_check_branch
    %2143 = sbr.rel (0) target = $region61
  $region60: #{rnn_predictor_forward.1} parent=0 // pred_region
    _
  $region61: #{rnn_predictor_forward.1} parent=0 // pred_fallthru
    _
  // Predicated region
  $region62: #{rnn_predictor_forward.1} parent=0 // pred_check
    _
  $region63: #{rnn_predictor_forward.1} parent=0 // pred_check_branch
    %2145 = sbr.rel (0) target = $region65
  $region64: #{rnn_predictor_forward.1} parent=0 // pred_region
    _
  $region65: #{rnn_predictor_forward.1} parent=0 // pred_fallthru
    _
  // Predicated region
  $region66: #{rnn_predictor_forward.1} parent=0 // pred_check
    _
  $region67: #{rnn_predictor_forward.1} parent=0 // pred_check_branch
    %2147 = sbr.rel (0) target = $region69
  $region68: #{rnn_predictor_forward.1} parent=0 // pred_region
    _
  $region69: #{rnn_predictor_forward.1} parent=0 // pred_fallthru
    _
  // Predicated region
  $region70: #{rnn_predictor_forward.1} parent=0 // pred_check
    _
  $region71: #{rnn_predictor_forward.1} parent=0 // pred_check_branch
    %2149 = sbr.rel (0) target = $region73
  $region72: #{rnn_predictor_forward.1} parent=0 // pred_region
    _
  $region73: #{rnn_predictor_forward.1} parent=0 // pred_fallthru
    _
  // Predicated region
  $region74: #{rnn_predictor_forward.1} parent=0 // pred_check
    _
  $region75: #{rnn_predictor_forward.1} parent=0 // pred_check_branch
    %2151 = sbr.rel (0) target = $region77
  $region76: #{rnn_predictor_forward.1} parent=0 // pred_region
    _
  $region77: #{rnn_predictor_forward.1} parent=0 // pred_fallthru
    _
  // Predicated region
  $region78: #{rnn_predictor_forward.1} parent=0 // pred_check
    _
  $region79: #{rnn_predictor_forward.1} parent=0 // pred_check_branch
    %2153 = sbr.rel (0) target = $region81
  $region80: #{rnn_predictor_forward.1} parent=0 // pred_region
    _
  $region81: #{rnn_predictor_forward.1} parent=0 // pred_fallthru
    _

</llo_original>
